<compile_context>
chip_gen: v7x
topology: tpu7x:2x2x1
jax: 0.10.0
libtpu: 0.0.40
codegen_flags: <defaults>
</compile_context>

<pallas_src>
import functools

import jax
import jax.numpy as jnp
from jax import lax
from jax.experimental import pallas as pl
from jax.experimental.pallas import tpu as pltpu


# ----------------------------- fused kernel --------------------------------- #

def _fused_cnn_kernel(*refs, layer_dims, width, hw, relu_flags, do_mean):
    """refs = (x_ref, w_0, b_0, ..., w_{L-1}, b_{L-1}, o_ref).

    x_ref : (1, C0, HW)           flattened NCHW slab for one batch element
    w_l   : (K*K, Cout_l, Cin_l)  per-tap weight matrices
    b_l   : (Cout_l, 1)
    o_ref : (1, 1, HW) if do_mean else (1, Cout_last, HW)
    """
    x_ref, o_ref = refs[0], refs[-1]
    cur = x_ref[0]                                        # (C0, HW) float32
    for l, (ksize, _cin, cout) in enumerate(layer_dims):
        w_ref = refs[1 + 2 * l]
        b_ref = refs[2 + 2 * l]
        # bias folded into accumulator init: single hoisted broadcast per layer
        acc = jnp.broadcast_to(b_ref[...], (cout, hw))
        for kh in range(ksize):
            for kw in range(ksize):
                off = kh * width + kw
                # spatial shift on the lane axis via the XLU; wrapped positions are
                # garbage but lie outside the valid region (cropped in the wrapper)
                x_sh = cur if off == 0 else pltpu.roll(cur, shift=hw - off, axis=1)
                acc = acc + jnp.dot(w_ref[kh * ksize + kw], x_sh,
                                    preferred_element_type=jnp.float32)
        if relu_flags[l]:
            acc = jnp.maximum(acc, 0.0)
        cur = acc
    if do_mean:
        # channel mean as a tiny MXU matmul with a constant (1/Cout) row vector
        cmean = jnp.full((1, cur.shape[0]), 1.0 / cur.shape[0], jnp.float32)
        o_ref[0] = jnp.dot(cmean, cur, preferred_element_type=jnp.float32)   # (1, HW)
    else:
        o_ref[0] = cur


# ----------------------------- segment runner -------------------------------- #

def _run_segment(x_nchw_f32, seg_params, seg_dims, relu_flags, do_mean):
    """Run one fused segment of stride-1 convs (kernel computes stride-1 everywhere).

    seg_params: [(w (K,K,Cin,Cout) HWIO, b (Cout,)), ...]
    seg_dims  : [(K, Cin, Cout), ...]
    """
    N, C0, H, W = x_nchw_f32.shape
    HW = H * W
    x_flat = x_nchw_f32.reshape(N, C0, HW)                 # lane-dense slab per batch elem

    args = [x_flat]
    in_specs = [pl.BlockSpec((1, C0, HW), lambda i: (i, 0, 0))]
    for (w, b), (k, cin, cout) in zip(seg_params, seg_dims):
        wk = jnp.transpose(w, (0, 1, 3, 2)).reshape(k * k, cout, cin)   # (tap, Cout, Cin)
        bk = b.reshape(cout, 1)
        args += [wk, bk]
        in_specs += [pl.BlockSpec((k * k, cout, cin), lambda i: (0, 0, 0)),
                     pl.BlockSpec((cout, 1), lambda i: (0, 0))]

    cout_last = seg_dims[-1][2]
    if do_mean:
        out_shape = jax.ShapeDtypeStruct((N, 1, HW), jnp.float32)
        out_specs = pl.BlockSpec((1, 1, HW), lambda i: (i, 0, 0))
    else:
        out_shape = jax.ShapeDtypeStruct((N, cout_last, HW), jnp.float32)
        out_specs = pl.BlockSpec((1, cout_last, HW), lambda i: (i, 0, 0))

    kernel = functools.partial(
        _fused_cnn_kernel,
        layer_dims=tuple(seg_dims), width=W, hw=HW,
        relu_flags=tuple(relu_flags), do_mean=do_mean)

    out = pl.pallas_call(
        kernel,
        out_shape=out_shape,
        grid=(N,),
        in_specs=in_specs,
        out_specs=out_specs,
        compiler_params=pltpu.CompilerParams(
            dimension_semantics=("parallel",)),        # 2 TCs on v7x; no-op on v5e/v6e
    )(*args)

    if do_mean:
        return out.reshape(N, H, W)
    return out.reshape(N, cout_last, H, W)


# ----------------------------- forward wrapper -------------------------------- #

def cnn_forward_pallas(x_nchw, params, conv_params):
    """params: [(w (K,K,Cin,Cout) HWIO, b (Cout,)), ...]; ReLU between layers,
    final layer has no activation, then mean over channel dim (torch dim=1)."""
    x = x_nchw.astype(jnp.float32)
    n_layers = len(params)
    i = 0
    while i < n_layers:
        # fuse a maximal run of stride-1 layers; a stride>1 layer closes its segment
        j = i
        while j < n_layers - 1 and conv_params[j][3] == 1:
            j += 1
        seg = list(range(i, j + 1))
        is_final = (j == n_layers - 1)

        seg_params = [params[l] for l in seg]
        seg_dims = [(conv_params[l][2], conv_params[l][0], conv_params[l][1]) for l in seg]
        relu_flags = [l != n_layers - 1 for l in seg]

        H, W = x.shape[2], x.shape[3]
        y = _run_segment(x, seg_params, seg_dims, relu_flags, do_mean=is_final)

        # crop garbage edges from the full-resolution accumulation, then apply the
        # (segment-closing) stride by subsampling (ReLU/crop commute with it).
        vh = H - sum(k - 1 for k, _, _ in seg_dims)
        vw = W - sum(k - 1 for k, _, _ in seg_dims)
        s = conv_params[j][3]
        if is_final:
            y = y[:, :vh, :vw]
            return y[:, ::s, ::s] if s > 1 else y
        y = y[:, :, :vh, :vw]
        x = y[:, :, ::s, ::s] if s > 1 else y
        i = j + 1


# ----------------------------- reference ------------------------------------- #

def cnn_forward_ref(x_nchw, params, conv_params):
    y = x_nchw.astype(jnp.float32)
    for i, ((w, b), (_, cout, _, s)) in enumerate(zip(params, conv_params)):
        y = lax.conv_general_dilated(
            y, w, window_strides=(s, s), padding="VALID",
            dimension_numbers=("NCHW", "HWIO", "NCHW"),
            precision=lax.Precision.HIGHEST)
        y = y + b.reshape(1, cout, 1, 1)
        if i < len(params) - 1:
            y = jax.nn.relu(y)
    return jnp.mean(y, axis=1)   # torch.mean(..., dim=1)


# ----------------------------- main ------------------------------------------ #

if __name__ == "__main__":
    # CNN(conv_params, act=ReLU, r=...) with conv_params = [(cin, cout, k, stride), ...]
    # `r` (receptive_field) is an attribute only; unused in forward.
    conv_params = [(4, 8, 3, 1), (8, 8, 3, 1), (8, 6, 3, 1)]

    key = jax.random.PRNGKey(0)
    params = []
    for (cin, cout, k, s) in conv_params:
        key, kw_key, kb_key = jax.random.split(key, 3)
        bound = 1.0 / float((cin * k * k) ** 0.5)          # nn.Conv2d-style uniform init
        w = jax.random.uniform(kw_key, (k, k, cin, cout), jnp.float32, -bound, bound)
        b = jax.random.uniform(kb_key, (cout,), jnp.float32, -bound, bound)
        params.append((w, b))

    key, kx = jax.random.split(key)
    x = jax.random.normal(kx, (2, 4, 16, 16), jnp.float32)   # NCHW, like PyTorch

    out = cnn_forward_pallas(x, params, conv_params)
    out = jax.block_until_ready(out)

    ref = cnn_forward_ref(x, params, conv_params)
    assert out.shape == ref.shape == (2, 10, 10), (out.shape, ref.shape)
    max_err = float(jnp.max(jnp.abs(out - ref)))
    assert jnp.allclose(out, ref, atol=2e-3, rtol=2e-3), max_err
    print("KERNEL_OK")
</pallas_src>

<mosaic_0001>
module attributes {stable_mosaic.version = 11 : i64} {
  func.func @_fused_cnn_kernel(%arg0: i32, %arg1: memref<1x4x256xf32, #tpu.memory_space<vmem>>, %arg2: memref<9x8x4xf32, #tpu.memory_space<vmem>>, %arg3: memref<8x1xf32, #tpu.memory_space<vmem>>, %arg4: memref<9x8x8xf32, #tpu.memory_space<vmem>>, %arg5: memref<8x1xf32, #tpu.memory_space<vmem>>, %arg6: memref<9x6x8xf32, #tpu.memory_space<vmem>>, %arg7: memref<6x1xf32, #tpu.memory_space<vmem>>, %arg8: memref<1x1x256xf32, #tpu.memory_space<vmem>>) attributes {dimension_semantics = [#tpu.dimension_semantics<parallel>], iteration_bounds = array<i64: 2>, scalar_prefetch = 0 : i64, scratch_operands = 0 : i64, tpu.core_type = #tpu.core_type<tc>, window_params = [{transform_indices = @transform_0, window_bounds = array<i64: 1, 4, 256>}, {pipeline_mode = #tpu.pipeline_mode<synchronous>, transform_indices = @transform_1, window_bounds = array<i64: 9, 8, 4>}, {pipeline_mode = #tpu.pipeline_mode<synchronous>, transform_indices = @transform_2, window_bounds = array<i64: 8, 1>}, {pipeline_mode = #tpu.pipeline_mode<synchronous>, transform_indices = @transform_3, window_bounds = array<i64: 9, 8, 8>}, {pipeline_mode = #tpu.pipeline_mode<synchronous>, transform_indices = @transform_4, window_bounds = array<i64: 8, 1>}, {pipeline_mode = #tpu.pipeline_mode<synchronous>, transform_indices = @transform_5, window_bounds = array<i64: 9, 6, 8>}, {pipeline_mode = #tpu.pipeline_mode<synchronous>, transform_indices = @transform_6, window_bounds = array<i64: 6, 1>}, {transform_indices = @transform_7, window_bounds = array<i64: 1, 1, 256>}]} {
    %c0 = arith.constant 0 : index
    %c0_0 = arith.constant 0 : index
    %c0_1 = arith.constant 0 : index
    %0 = vector.load %arg1[%c0, %c0_0, %c0_1] : memref<1x4x256xf32, #tpu.memory_space<vmem>>, vector<1x4x256xf32>
    %1 = vector.shape_cast %0 : vector<1x4x256xf32> to vector<4x256xf32>
    %c0_2 = arith.constant 0 : index
    %c0_3 = arith.constant 0 : index
    %2 = vector.load %arg3[%c0_2, %c0_3] : memref<8x1xf32, #tpu.memory_space<vmem>>, vector<8x1xf32>
    %3 = vector.shape_cast %2 : vector<8x1xf32> to vector<8x1xf32>
    %4 = vector.broadcast %3 : vector<8x1xf32> to vector<8x256xf32>
    %c0_4 = arith.constant 0 : index
    %c0_5 = arith.constant 0 : index
    %c0_6 = arith.constant 0 : index
    %5 = vector.load %arg2[%c0_4, %c0_5, %c0_6] : memref<9x8x4xf32, #tpu.memory_space<vmem>>, vector<1x8x4xf32>
    %6 = vector.shape_cast %5 : vector<1x8x4xf32> to vector<8x4xf32>
    %cst = arith.constant dense<0.000000e+00> : vector<8x256xf32>
    %7 = tpu.matmul %6, %1, %cst {dimension_numbers = #tpu.dot_dimension_numbers<[1], [0], [0], [1], [0, 0, 1, 1], [], []>} : vector<8x4xf32>, vector<4x256xf32>, vector<8x256xf32> -> vector<8x256xf32>
    %8 = arith.addf %4, %7 : vector<8x256xf32>
    %c255_i32 = arith.constant 255 : i32
    %9 = tpu.dynamic_rotate %1 by %c255_i32 dim 1 : vector<4x256xf32>, i32 -> vector<4x256xf32>
    %c1 = arith.constant 1 : index
    %c0_7 = arith.constant 0 : index
    %c0_8 = arith.constant 0 : index
    %10 = vector.load %arg2[%c1, %c0_7, %c0_8] : memref<9x8x4xf32, #tpu.memory_space<vmem>>, vector<1x8x4xf32>
    %11 = vector.shape_cast %10 : vector<1x8x4xf32> to vector<8x4xf32>
    %cst_9 = arith.constant dense<0.000000e+00> : vector<8x256xf32>
    %12 = tpu.matmul %11, %9, %cst_9 {dimension_numbers = #tpu.dot_dimension_numbers<[1], [0], [0], [1], [0, 0, 1, 1], [], []>} : vector<8x4xf32>, vector<4x256xf32>, vector<8x256xf32> -> vector<8x256xf32>
    %13 = arith.addf %8, %12 : vector<8x256xf32>
    %c254_i32 = arith.constant 254 : i32
    %14 = tpu.dynamic_rotate %1 by %c254_i32 dim 1 : vector<4x256xf32>, i32 -> vector<4x256xf32>
    %c2 = arith.constant 2 : index
    %c0_10 = arith.constant 0 : index
    %c0_11 = arith.constant 0 : index
    %15 = vector.load %arg2[%c2, %c0_10, %c0_11] : memref<9x8x4xf32, #tpu.memory_space<vmem>>, vector<1x8x4xf32>
    %16 = vector.shape_cast %15 : vector<1x8x4xf32> to vector<8x4xf32>
    %cst_12 = arith.constant dense<0.000000e+00> : vector<8x256xf32>
    %17 = tpu.matmul %16, %14, %cst_12 {dimension_numbers = #tpu.dot_dimension_numbers<[1], [0], [0], [1], [0, 0, 1, 1], [], []>} : vector<8x4xf32>, vector<4x256xf32>, vector<8x256xf32> -> vector<8x256xf32>
    %18 = arith.addf %13, %17 : vector<8x256xf32>
    %c240_i32 = arith.constant 240 : i32
    %19 = tpu.dynamic_rotate %1 by %c240_i32 dim 1 : vector<4x256xf32>, i32 -> vector<4x256xf32>
    %c3 = arith.constant 3 : index
    %c0_13 = arith.constant 0 : index
    %c0_14 = arith.constant 0 : index
    %20 = vector.load %arg2[%c3, %c0_13, %c0_14] : memref<9x8x4xf32, #tpu.memory_space<vmem>>, vector<1x8x4xf32>
    %21 = vector.shape_cast %20 : vector<1x8x4xf32> to vector<8x4xf32>
    %cst_15 = arith.constant dense<0.000000e+00> : vector<8x256xf32>
    %22 = tpu.matmul %21, %19, %cst_15 {dimension_numbers = #tpu.dot_dimension_numbers<[1], [0], [0], [1], [0, 0, 1, 1], [], []>} : vector<8x4xf32>, vector<4x256xf32>, vector<8x256xf32> -> vector<8x256xf32>
    %23 = arith.addf %18, %22 : vector<8x256xf32>
    %c239_i32 = arith.constant 239 : i32
    %24 = tpu.dynamic_rotate %1 by %c239_i32 dim 1 : vector<4x256xf32>, i32 -> vector<4x256xf32>
    %c4 = arith.constant 4 : index
    %c0_16 = arith.constant 0 : index
    %c0_17 = arith.constant 0 : index
    %25 = vector.load %arg2[%c4, %c0_16, %c0_17] : memref<9x8x4xf32, #tpu.memory_space<vmem>>, vector<1x8x4xf32>
    %26 = vector.shape_cast %25 : vector<1x8x4xf32> to vector<8x4xf32>
    %cst_18 = arith.constant dense<0.000000e+00> : vector<8x256xf32>
    %27 = tpu.matmul %26, %24, %cst_18 {dimension_numbers = #tpu.dot_dimension_numbers<[1], [0], [0], [1], [0, 0, 1, 1], [], []>} : vector<8x4xf32>, vector<4x256xf32>, vector<8x256xf32> -> vector<8x256xf32>
    %28 = arith.addf %23, %27 : vector<8x256xf32>
    %c238_i32 = arith.constant 238 : i32
    %29 = tpu.dynamic_rotate %1 by %c238_i32 dim 1 : vector<4x256xf32>, i32 -> vector<4x256xf32>
    %c5 = arith.constant 5 : index
    %c0_19 = arith.constant 0 : index
    %c0_20 = arith.constant 0 : index
    %30 = vector.load %arg2[%c5, %c0_19, %c0_20] : memref<9x8x4xf32, #tpu.memory_space<vmem>>, vector<1x8x4xf32>
    %31 = vector.shape_cast %30 : vector<1x8x4xf32> to vector<8x4xf32>
    %cst_21 = arith.constant dense<0.000000e+00> : vector<8x256xf32>
    %32 = tpu.matmul %31, %29, %cst_21 {dimension_numbers = #tpu.dot_dimension_numbers<[1], [0], [0], [1], [0, 0, 1, 1], [], []>} : vector<8x4xf32>, vector<4x256xf32>, vector<8x256xf32> -> vector<8x256xf32>
    %33 = arith.addf %28, %32 : vector<8x256xf32>
    %c224_i32 = arith.constant 224 : i32
    %34 = tpu.dynamic_rotate %1 by %c224_i32 dim 1 : vector<4x256xf32>, i32 -> vector<4x256xf32>
    %c6 = arith.constant 6 : index
    %c0_22 = arith.constant 0 : index
    %c0_23 = arith.constant 0 : index
    %35 = vector.load %arg2[%c6, %c0_22, %c0_23] : memref<9x8x4xf32, #tpu.memory_space<vmem>>, vector<1x8x4xf32>
    %36 = vector.shape_cast %35 : vector<1x8x4xf32> to vector<8x4xf32>
    %cst_24 = arith.constant dense<0.000000e+00> : vector<8x256xf32>
    %37 = tpu.matmul %36, %34, %cst_24 {dimension_numbers = #tpu.dot_dimension_numbers<[1], [0], [0], [1], [0, 0, 1, 1], [], []>} : vector<8x4xf32>, vector<4x256xf32>, vector<8x256xf32> -> vector<8x256xf32>
    %38 = arith.addf %33, %37 : vector<8x256xf32>
    %c223_i32 = arith.constant 223 : i32
    %39 = tpu.dynamic_rotate %1 by %c223_i32 dim 1 : vector<4x256xf32>, i32 -> vector<4x256xf32>
    %c7 = arith.constant 7 : index
    %c0_25 = arith.constant 0 : index
    %c0_26 = arith.constant 0 : index
    %40 = vector.load %arg2[%c7, %c0_25, %c0_26] : memref<9x8x4xf32, #tpu.memory_space<vmem>>, vector<1x8x4xf32>
    %41 = vector.shape_cast %40 : vector<1x8x4xf32> to vector<8x4xf32>
    %cst_27 = arith.constant dense<0.000000e+00> : vector<8x256xf32>
    %42 = tpu.matmul %41, %39, %cst_27 {dimension_numbers = #tpu.dot_dimension_numbers<[1], [0], [0], [1], [0, 0, 1, 1], [], []>} : vector<8x4xf32>, vector<4x256xf32>, vector<8x256xf32> -> vector<8x256xf32>
    %43 = arith.addf %38, %42 : vector<8x256xf32>
    %c222_i32 = arith.constant 222 : i32
    %44 = tpu.dynamic_rotate %1 by %c222_i32 dim 1 : vector<4x256xf32>, i32 -> vector<4x256xf32>
    %c8 = arith.constant 8 : index
    %c0_28 = arith.constant 0 : index
    %c0_29 = arith.constant 0 : index
    %45 = vector.load %arg2[%c8, %c0_28, %c0_29] : memref<9x8x4xf32, #tpu.memory_space<vmem>>, vector<1x8x4xf32>
    %46 = vector.shape_cast %45 : vector<1x8x4xf32> to vector<8x4xf32>
    %cst_30 = arith.constant dense<0.000000e+00> : vector<8x256xf32>
    %47 = tpu.matmul %46, %44, %cst_30 {dimension_numbers = #tpu.dot_dimension_numbers<[1], [0], [0], [1], [0, 0, 1, 1], [], []>} : vector<8x4xf32>, vector<4x256xf32>, vector<8x256xf32> -> vector<8x256xf32>
    %48 = arith.addf %43, %47 : vector<8x256xf32>
    %cst_31 = arith.constant 0.000000e+00 : f32
    %49 = vector.broadcast %cst_31 : f32 to vector<8x256xf32>
    %50 = arith.maximumf %48, %49 : vector<8x256xf32>
    %c0_32 = arith.constant 0 : index
    %c0_33 = arith.constant 0 : index
    %51 = vector.load %arg5[%c0_32, %c0_33] : memref<8x1xf32, #tpu.memory_space<vmem>>, vector<8x1xf32>
    %52 = vector.shape_cast %51 : vector<8x1xf32> to vector<8x1xf32>
    %53 = vector.broadcast %52 : vector<8x1xf32> to vector<8x256xf32>
    %c0_34 = arith.constant 0 : index
    %c0_35 = arith.constant 0 : index
    %c0_36 = arith.constant 0 : index
    %54 = vector.load %arg4[%c0_34, %c0_35, %c0_36] : memref<9x8x8xf32, #tpu.memory_space<vmem>>, vector<1x8x8xf32>
    %55 = vector.shape_cast %54 : vector<1x8x8xf32> to vector<8x8xf32>
    %cst_37 = arith.constant dense<0.000000e+00> : vector<8x256xf32>
    %56 = tpu.matmul %55, %50, %cst_37 {dimension_numbers = #tpu.dot_dimension_numbers<[1], [0], [0], [1], [0, 0, 1, 1], [], []>} : vector<8x8xf32>, vector<8x256xf32>, vector<8x256xf32> -> vector<8x256xf32>
    %57 = arith.addf %53, %56 : vector<8x256xf32>
    %c255_i32_38 = arith.constant 255 : i32
    %58 = tpu.dynamic_rotate %50 by %c255_i32_38 dim 1 : vector<8x256xf32>, i32 -> vector<8x256xf32>
    %c1_39 = arith.constant 1 : index
    %c0_40 = arith.constant 0 : index
    %c0_41 = arith.constant 0 : index
    %59 = vector.load %arg4[%c1_39, %c0_40, %c0_41] : memref<9x8x8xf32, #tpu.memory_space<vmem>>, vector<1x8x8xf32>
    %60 = vector.shape_cast %59 : vector<1x8x8xf32> to vector<8x8xf32>
    %cst_42 = arith.constant dense<0.000000e+00> : vector<8x256xf32>
    %61 = tpu.matmul %60, %58, %cst_42 {dimension_numbers = #tpu.dot_dimension_numbers<[1], [0], [0], [1], [0, 0, 1, 1], [], []>} : vector<8x8xf32>, vector<8x256xf32>, vector<8x256xf32> -> vector<8x256xf32>
    %62 = arith.addf %57, %61 : vector<8x256xf32>
    %c254_i32_43 = arith.constant 254 : i32
    %63 = tpu.dynamic_rotate %50 by %c254_i32_43 dim 1 : vector<8x256xf32>, i32 -> vector<8x256xf32>
    %c2_44 = arith.constant 2 : index
    %c0_45 = arith.constant 0 : index
    %c0_46 = arith.constant 0 : index
    %64 = vector.load %arg4[%c2_44, %c0_45, %c0_46] : memref<9x8x8xf32, #tpu.memory_space<vmem>>, vector<1x8x8xf32>
    %65 = vector.shape_cast %64 : vector<1x8x8xf32> to vector<8x8xf32>
    %cst_47 = arith.constant dense<0.000000e+00> : vector<8x256xf32>
    %66 = tpu.matmul %65, %63, %cst_47 {dimension_numbers = #tpu.dot_dimension_numbers<[1], [0], [0], [1], [0, 0, 1, 1], [], []>} : vector<8x8xf32>, vector<8x256xf32>, vector<8x256xf32> -> vector<8x256xf32>
    %67 = arith.addf %62, %66 : vector<8x256xf32>
    %c240_i32_48 = arith.constant 240 : i32
    %68 = tpu.dynamic_rotate %50 by %c240_i32_48 dim 1 : vector<8x256xf32>, i32 -> vector<8x256xf32>
    %c3_49 = arith.constant 3 : index
    %c0_50 = arith.constant 0 : index
    %c0_51 = arith.constant 0 : index
    %69 = vector.load %arg4[%c3_49, %c0_50, %c0_51] : memref<9x8x8xf32, #tpu.memory_space<vmem>>, vector<1x8x8xf32>
    %70 = vector.shape_cast %69 : vector<1x8x8xf32> to vector<8x8xf32>
    %cst_52 = arith.constant dense<0.000000e+00> : vector<8x256xf32>
    %71 = tpu.matmul %70, %68, %cst_52 {dimension_numbers = #tpu.dot_dimension_numbers<[1], [0], [0], [1], [0, 0, 1, 1], [], []>} : vector<8x8xf32>, vector<8x256xf32>, vector<8x256xf32> -> vector<8x256xf32>
    %72 = arith.addf %67, %71 : vector<8x256xf32>
    %c239_i32_53 = arith.constant 239 : i32
    %73 = tpu.dynamic_rotate %50 by %c239_i32_53 dim 1 : vector<8x256xf32>, i32 -> vector<8x256xf32>
    %c4_54 = arith.constant 4 : index
    %c0_55 = arith.constant 0 : index
    %c0_56 = arith.constant 0 : index
    %74 = vector.load %arg4[%c4_54, %c0_55, %c0_56] : memref<9x8x8xf32, #tpu.memory_space<vmem>>, vector<1x8x8xf32>
    %75 = vector.shape_cast %74 : vector<1x8x8xf32> to vector<8x8xf32>
    %cst_57 = arith.constant dense<0.000000e+00> : vector<8x256xf32>
    %76 = tpu.matmul %75, %73, %cst_57 {dimension_numbers = #tpu.dot_dimension_numbers<[1], [0], [0], [1], [0, 0, 1, 1], [], []>} : vector<8x8xf32>, vector<8x256xf32>, vector<8x256xf32> -> vector<8x256xf32>
    %77 = arith.addf %72, %76 : vector<8x256xf32>
    %c238_i32_58 = arith.constant 238 : i32
    %78 = tpu.dynamic_rotate %50 by %c238_i32_58 dim 1 : vector<8x256xf32>, i32 -> vector<8x256xf32>
    %c5_59 = arith.constant 5 : index
    %c0_60 = arith.constant 0 : index
    %c0_61 = arith.constant 0 : index
    %79 = vector.load %arg4[%c5_59, %c0_60, %c0_61] : memref<9x8x8xf32, #tpu.memory_space<vmem>>, vector<1x8x8xf32>
    %80 = vector.shape_cast %79 : vector<1x8x8xf32> to vector<8x8xf32>
    %cst_62 = arith.constant dense<0.000000e+00> : vector<8x256xf32>
    %81 = tpu.matmul %80, %78, %cst_62 {dimension_numbers = #tpu.dot_dimension_numbers<[1], [0], [0], [1], [0, 0, 1, 1], [], []>} : vector<8x8xf32>, vector<8x256xf32>, vector<8x256xf32> -> vector<8x256xf32>
    %82 = arith.addf %77, %81 : vector<8x256xf32>
    %c224_i32_63 = arith.constant 224 : i32
    %83 = tpu.dynamic_rotate %50 by %c224_i32_63 dim 1 : vector<8x256xf32>, i32 -> vector<8x256xf32>
    %c6_64 = arith.constant 6 : index
    %c0_65 = arith.constant 0 : index
    %c0_66 = arith.constant 0 : index
    %84 = vector.load %arg4[%c6_64, %c0_65, %c0_66] : memref<9x8x8xf32, #tpu.memory_space<vmem>>, vector<1x8x8xf32>
    %85 = vector.shape_cast %84 : vector<1x8x8xf32> to vector<8x8xf32>
    %cst_67 = arith.constant dense<0.000000e+00> : vector<8x256xf32>
    %86 = tpu.matmul %85, %83, %cst_67 {dimension_numbers = #tpu.dot_dimension_numbers<[1], [0], [0], [1], [0, 0, 1, 1], [], []>} : vector<8x8xf32>, vector<8x256xf32>, vector<8x256xf32> -> vector<8x256xf32>
    %87 = arith.addf %82, %86 : vector<8x256xf32>
    %c223_i32_68 = arith.constant 223 : i32
    %88 = tpu.dynamic_rotate %50 by %c223_i32_68 dim 1 : vector<8x256xf32>, i32 -> vector<8x256xf32>
    %c7_69 = arith.constant 7 : index
    %c0_70 = arith.constant 0 : index
    %c0_71 = arith.constant 0 : index
    %89 = vector.load %arg4[%c7_69, %c0_70, %c0_71] : memref<9x8x8xf32, #tpu.memory_space<vmem>>, vector<1x8x8xf32>
    %90 = vector.shape_cast %89 : vector<1x8x8xf32> to vector<8x8xf32>
    %cst_72 = arith.constant dense<0.000000e+00> : vector<8x256xf32>
    %91 = tpu.matmul %90, %88, %cst_72 {dimension_numbers = #tpu.dot_dimension_numbers<[1], [0], [0], [1], [0, 0, 1, 1], [], []>} : vector<8x8xf32>, vector<8x256xf32>, vector<8x256xf32> -> vector<8x256xf32>
    %92 = arith.addf %87, %91 : vector<8x256xf32>
    %c222_i32_73 = arith.constant 222 : i32
    %93 = tpu.dynamic_rotate %50 by %c222_i32_73 dim 1 : vector<8x256xf32>, i32 -> vector<8x256xf32>
    %c8_74 = arith.constant 8 : index
    %c0_75 = arith.constant 0 : index
    %c0_76 = arith.constant 0 : index
    %94 = vector.load %arg4[%c8_74, %c0_75, %c0_76] : memref<9x8x8xf32, #tpu.memory_space<vmem>>, vector<1x8x8xf32>
    %95 = vector.shape_cast %94 : vector<1x8x8xf32> to vector<8x8xf32>
    %cst_77 = arith.constant dense<0.000000e+00> : vector<8x256xf32>
    %96 = tpu.matmul %95, %93, %cst_77 {dimension_numbers = #tpu.dot_dimension_numbers<[1], [0], [0], [1], [0, 0, 1, 1], [], []>} : vector<8x8xf32>, vector<8x256xf32>, vector<8x256xf32> -> vector<8x256xf32>
    %97 = arith.addf %92, %96 : vector<8x256xf32>
    %cst_78 = arith.constant 0.000000e+00 : f32
    %98 = vector.broadcast %cst_78 : f32 to vector<8x256xf32>
    %99 = arith.maximumf %97, %98 : vector<8x256xf32>
    %c0_79 = arith.constant 0 : index
    %c0_80 = arith.constant 0 : index
    %100 = vector.load %arg7[%c0_79, %c0_80] : memref<6x1xf32, #tpu.memory_space<vmem>>, vector<6x1xf32>
    %101 = vector.shape_cast %100 : vector<6x1xf32> to vector<6x1xf32>
    %102 = vector.broadcast %101 : vector<6x1xf32> to vector<6x256xf32>
    %c0_81 = arith.constant 0 : index
    %c0_82 = arith.constant 0 : index
    %c0_83 = arith.constant 0 : index
    %103 = vector.load %arg6[%c0_81, %c0_82, %c0_83] : memref<9x6x8xf32, #tpu.memory_space<vmem>>, vector<1x6x8xf32>
    %104 = vector.shape_cast %103 : vector<1x6x8xf32> to vector<6x8xf32>
    %cst_84 = arith.constant dense<0.000000e+00> : vector<6x256xf32>
    %105 = tpu.matmul %104, %99, %cst_84 {dimension_numbers = #tpu.dot_dimension_numbers<[1], [0], [0], [1], [0, 0, 1, 1], [], []>} : vector<6x8xf32>, vector<8x256xf32>, vector<6x256xf32> -> vector<6x256xf32>
    %106 = arith.addf %102, %105 : vector<6x256xf32>
    %c255_i32_85 = arith.constant 255 : i32
    %107 = tpu.dynamic_rotate %99 by %c255_i32_85 dim 1 : vector<8x256xf32>, i32 -> vector<8x256xf32>
    %c1_86 = arith.constant 1 : index
    %c0_87 = arith.constant 0 : index
    %c0_88 = arith.constant 0 : index
    %108 = vector.load %arg6[%c1_86, %c0_87, %c0_88] : memref<9x6x8xf32, #tpu.memory_space<vmem>>, vector<1x6x8xf32>
    %109 = vector.shape_cast %108 : vector<1x6x8xf32> to vector<6x8xf32>
    %cst_89 = arith.constant dense<0.000000e+00> : vector<6x256xf32>
    %110 = tpu.matmul %109, %107, %cst_89 {dimension_numbers = #tpu.dot_dimension_numbers<[1], [0], [0], [1], [0, 0, 1, 1], [], []>} : vector<6x8xf32>, vector<8x256xf32>, vector<6x256xf32> -> vector<6x256xf32>
    %111 = arith.addf %106, %110 : vector<6x256xf32>
    %c254_i32_90 = arith.constant 254 : i32
    %112 = tpu.dynamic_rotate %99 by %c254_i32_90 dim 1 : vector<8x256xf32>, i32 -> vector<8x256xf32>
    %c2_91 = arith.constant 2 : index
    %c0_92 = arith.constant 0 : index
    %c0_93 = arith.constant 0 : index
    %113 = vector.load %arg6[%c2_91, %c0_92, %c0_93] : memref<9x6x8xf32, #tpu.memory_space<vmem>>, vector<1x6x8xf32>
    %114 = vector.shape_cast %113 : vector<1x6x8xf32> to vector<6x8xf32>
    %cst_94 = arith.constant dense<0.000000e+00> : vector<6x256xf32>
    %115 = tpu.matmul %114, %112, %cst_94 {dimension_numbers = #tpu.dot_dimension_numbers<[1], [0], [0], [1], [0, 0, 1, 1], [], []>} : vector<6x8xf32>, vector<8x256xf32>, vector<6x256xf32> -> vector<6x256xf32>
    %116 = arith.addf %111, %115 : vector<6x256xf32>
    %c240_i32_95 = arith.constant 240 : i32
    %117 = tpu.dynamic_rotate %99 by %c240_i32_95 dim 1 : vector<8x256xf32>, i32 -> vector<8x256xf32>
    %c3_96 = arith.constant 3 : index
    %c0_97 = arith.constant 0 : index
    %c0_98 = arith.constant 0 : index
    %118 = vector.load %arg6[%c3_96, %c0_97, %c0_98] : memref<9x6x8xf32, #tpu.memory_space<vmem>>, vector<1x6x8xf32>
    %119 = vector.shape_cast %118 : vector<1x6x8xf32> to vector<6x8xf32>
    %cst_99 = arith.constant dense<0.000000e+00> : vector<6x256xf32>
    %120 = tpu.matmul %119, %117, %cst_99 {dimension_numbers = #tpu.dot_dimension_numbers<[1], [0], [0], [1], [0, 0, 1, 1], [], []>} : vector<6x8xf32>, vector<8x256xf32>, vector<6x256xf32> -> vector<6x256xf32>
    %121 = arith.addf %116, %120 : vector<6x256xf32>
    %c239_i32_100 = arith.constant 239 : i32
    %122 = tpu.dynamic_rotate %99 by %c239_i32_100 dim 1 : vector<8x256xf32>, i32 -> vector<8x256xf32>
    %c4_101 = arith.constant 4 : index
    %c0_102 = arith.constant 0 : index
    %c0_103 = arith.constant 0 : index
    %123 = vector.load %arg6[%c4_101, %c0_102, %c0_103] : memref<9x6x8xf32, #tpu.memory_space<vmem>>, vector<1x6x8xf32>
    %124 = vector.shape_cast %123 : vector<1x6x8xf32> to vector<6x8xf32>
    %cst_104 = arith.constant dense<0.000000e+00> : vector<6x256xf32>
    %125 = tpu.matmul %124, %122, %cst_104 {dimension_numbers = #tpu.dot_dimension_numbers<[1], [0], [0], [1], [0, 0, 1, 1], [], []>} : vector<6x8xf32>, vector<8x256xf32>, vector<6x256xf32> -> vector<6x256xf32>
    %126 = arith.addf %121, %125 : vector<6x256xf32>
    %c238_i32_105 = arith.constant 238 : i32
    %127 = tpu.dynamic_rotate %99 by %c238_i32_105 dim 1 : vector<8x256xf32>, i32 -> vector<8x256xf32>
    %c5_106 = arith.constant 5 : index
    %c0_107 = arith.constant 0 : index
    %c0_108 = arith.constant 0 : index
    %128 = vector.load %arg6[%c5_106, %c0_107, %c0_108] : memref<9x6x8xf32, #tpu.memory_space<vmem>>, vector<1x6x8xf32>
    %129 = vector.shape_cast %128 : vector<1x6x8xf32> to vector<6x8xf32>
    %cst_109 = arith.constant dense<0.000000e+00> : vector<6x256xf32>
    %130 = tpu.matmul %129, %127, %cst_109 {dimension_numbers = #tpu.dot_dimension_numbers<[1], [0], [0], [1], [0, 0, 1, 1], [], []>} : vector<6x8xf32>, vector<8x256xf32>, vector<6x256xf32> -> vector<6x256xf32>
    %131 = arith.addf %126, %130 : vector<6x256xf32>
    %c224_i32_110 = arith.constant 224 : i32
    %132 = tpu.dynamic_rotate %99 by %c224_i32_110 dim 1 : vector<8x256xf32>, i32 -> vector<8x256xf32>
    %c6_111 = arith.constant 6 : index
    %c0_112 = arith.constant 0 : index
    %c0_113 = arith.constant 0 : index
    %133 = vector.load %arg6[%c6_111, %c0_112, %c0_113] : memref<9x6x8xf32, #tpu.memory_space<vmem>>, vector<1x6x8xf32>
    %134 = vector.shape_cast %133 : vector<1x6x8xf32> to vector<6x8xf32>
    %cst_114 = arith.constant dense<0.000000e+00> : vector<6x256xf32>
    %135 = tpu.matmul %134, %132, %cst_114 {dimension_numbers = #tpu.dot_dimension_numbers<[1], [0], [0], [1], [0, 0, 1, 1], [], []>} : vector<6x8xf32>, vector<8x256xf32>, vector<6x256xf32> -> vector<6x256xf32>
    %136 = arith.addf %131, %135 : vector<6x256xf32>
    %c223_i32_115 = arith.constant 223 : i32
    %137 = tpu.dynamic_rotate %99 by %c223_i32_115 dim 1 : vector<8x256xf32>, i32 -> vector<8x256xf32>
    %c7_116 = arith.constant 7 : index
    %c0_117 = arith.constant 0 : index
    %c0_118 = arith.constant 0 : index
    %138 = vector.load %arg6[%c7_116, %c0_117, %c0_118] : memref<9x6x8xf32, #tpu.memory_space<vmem>>, vector<1x6x8xf32>
    %139 = vector.shape_cast %138 : vector<1x6x8xf32> to vector<6x8xf32>
    %cst_119 = arith.constant dense<0.000000e+00> : vector<6x256xf32>
    %140 = tpu.matmul %139, %137, %cst_119 {dimension_numbers = #tpu.dot_dimension_numbers<[1], [0], [0], [1], [0, 0, 1, 1], [], []>} : vector<6x8xf32>, vector<8x256xf32>, vector<6x256xf32> -> vector<6x256xf32>
    %141 = arith.addf %136, %140 : vector<6x256xf32>
    %c222_i32_120 = arith.constant 222 : i32
    %142 = tpu.dynamic_rotate %99 by %c222_i32_120 dim 1 : vector<8x256xf32>, i32 -> vector<8x256xf32>
    %c8_121 = arith.constant 8 : index
    %c0_122 = arith.constant 0 : index
    %c0_123 = arith.constant 0 : index
    %143 = vector.load %arg6[%c8_121, %c0_122, %c0_123] : memref<9x6x8xf32, #tpu.memory_space<vmem>>, vector<1x6x8xf32>
    %144 = vector.shape_cast %143 : vector<1x6x8xf32> to vector<6x8xf32>
    %cst_124 = arith.constant dense<0.000000e+00> : vector<6x256xf32>
    %145 = tpu.matmul %144, %142, %cst_124 {dimension_numbers = #tpu.dot_dimension_numbers<[1], [0], [0], [1], [0, 0, 1, 1], [], []>} : vector<6x8xf32>, vector<8x256xf32>, vector<6x256xf32> -> vector<6x256xf32>
    %146 = arith.addf %141, %145 : vector<6x256xf32>
    %cst_125 = arith.constant 0.166666672 : f32
    %147 = vector.broadcast %cst_125 : f32 to vector<1x6xf32>
    %cst_126 = arith.constant dense<0.000000e+00> : vector<1x256xf32>
    %148 = tpu.matmul %147, %146, %cst_126 {dimension_numbers = #tpu.dot_dimension_numbers<[1], [0], [0], [1], [0, 0, 1, 1], [], []>} : vector<1x6xf32>, vector<6x256xf32>, vector<1x256xf32> -> vector<1x256xf32>
    %c0_127 = arith.constant 0 : index
    %c0_128 = arith.constant 0 : index
    %c0_129 = arith.constant 0 : index
    %149 = vector.load %arg8[%c0_127, %c0_128, %c0_129] : memref<1x1x256xf32, #tpu.memory_space<vmem>>, vector<1x1x256xf32>
    %150 = vector.shape_cast %149 : vector<1x1x256xf32> to vector<1x256xf32>
    %151 = vector.shape_cast %148 : vector<1x256xf32> to vector<1x1x256xf32>
    tpu.vector_store %arg8[%c0_127, %c0_128, %c0_129], %151 {strides = array<i32>} : memref<1x1x256xf32, #tpu.memory_space<vmem>>, vector<1x1x256xf32>,
    return
  }
  func.func @transform_0(%arg0: i32) -> (i32, i32, i32) {
    %c0_i32 = arith.constant 0 : i32
    %c0_i32_0 = arith.constant 0 : i32
    %c0_i32_1 = arith.constant 0 : i32
    return %arg0, %c0_i32, %c0_i32_0 : i32, i32, i32
  }
  func.func @transform_1(%arg0: i32) -> (i32, i32, i32) {
    %c0_i32 = arith.constant 0 : i32
    %c0_i32_0 = arith.constant 0 : i32
    %c0_i32_1 = arith.constant 0 : i32
    %c0_i32_2 = arith.constant 0 : i32
    return %c0_i32, %c0_i32_0, %c0_i32_1 : i32, i32, i32
  }
  func.func @transform_2(%arg0: i32) -> (i32, i32) {
    %c0_i32 = arith.constant 0 : i32
    %c0_i32_0 = arith.constant 0 : i32
    %c0_i32_1 = arith.constant 0 : i32
    return %c0_i32, %c0_i32_0 : i32, i32
  }
  func.func @transform_3(%arg0: i32) -> (i32, i32, i32) {
    %c0_i32 = arith.constant 0 : i32
    %c0_i32_0 = arith.constant 0 : i32
    %c0_i32_1 = arith.constant 0 : i32
    %c0_i32_2 = arith.constant 0 : i32
    return %c0_i32, %c0_i32_0, %c0_i32_1 : i32, i32, i32
  }
  func.func @transform_4(%arg0: i32) -> (i32, i32) {
    %c0_i32 = arith.constant 0 : i32
    %c0_i32_0 = arith.constant 0 : i32
    %c0_i32_1 = arith.constant 0 : i32
    return %c0_i32, %c0_i32_0 : i32, i32
  }
  func.func @transform_5(%arg0: i32) -> (i32, i32, i32) {
    %c0_i32 = arith.constant 0 : i32
    %c0_i32_0 = arith.constant 0 : i32
    %c0_i32_1 = arith.constant 0 : i32
    %c0_i32_2 = arith.constant 0 : i32
    return %c0_i32, %c0_i32_0, %c0_i32_1 : i32, i32, i32
  }
  func.func @transform_6(%arg0: i32) -> (i32, i32) {
    %c0_i32 = arith.constant 0 : i32
    %c0_i32_0 = arith.constant 0 : i32
    %c0_i32_1 = arith.constant 0 : i32
    return %c0_i32, %c0_i32_0 : i32, i32
  }
  func.func @transform_7(%arg0: i32) -> (i32, i32, i32) {
    %c0_i32 = arith.constant 0 : i32
    %c0_i32_0 = arith.constant 0 : i32
    %c0_i32_1 = arith.constant 0 : i32
    return %arg0, %c0_i32, %c0_i32_0 : i32, i32, i32
  }
}

</mosaic_0001>

<llo_original>
// kernel: tpu_custom_call.1
$region0: #{tpu_custom_call.1}
  #allocation0 [shape = 'u32[]', space=smem, size = 0x4, offset = 0x4, fixed_abs, tag = 'smem constant byte address 0x4 - core index']
  #allocation1 [shape = 'u32[144,128]{1,0:T(1,128)}', space=vmem, size = 0x12000, scoped, tag = 'internal scratch']
  %s0 = inlined_call_operand.vmem [shape: f32[2,4,256], index: 0, kind: input, shape index: {}]
  %s1 = inlined_call_operand.vmem [shape: f32[9,8,4], index: 1, kind: input, shape index: {}]
  %s2 = inlined_call_operand.vmem [shape: f32[8,1], index: 2, kind: input, shape index: {}]
  %s3 = inlined_call_operand.vmem [shape: f32[9,8,8], index: 3, kind: input, shape index: {}]
  %s4 = inlined_call_operand.vmem [shape: f32[8,1], index: 4, kind: input, shape index: {}]
  %s5 = inlined_call_operand.vmem [shape: f32[9,6,8], index: 5, kind: input, shape index: {}]
  %s6 = inlined_call_operand.vmem [shape: f32[6,1], index: 6, kind: input, shape index: {}]
  %s7 = inlined_call_operand.hbm [shape: f32[2,1,256], index: 7, kind: output, shape index: {}]
  %s8 = sld [smem:[#allocation0]]
  $region61: #{tpu_custom_call.1} parent=0
    _
  %s10 = ssub.s32 1, %s8
  %s11 = scalar_select 0, %s10, %s8
  $region1: #{tpu_custom_call.1} parent=0
    #allocation2 [shape = 'u8[2048]{0}', space=vmem, size = 0x800, scoped, tag = 'output window, operand 0']
    #allocation3 [shape = 's32[2]{0}', space=sflag, size = 0x8, scoped, tag = 'scoped memory for tpu_custom_call.1']
    %12 = vsyncpa [#allocation3], 0
    %s13 = scalar_lea.sflag [#allocation3], 1
    %14 = vsyncpa %s13, 0
    loop: start=0, step=1, limit=4
    $region2: #{tpu_custom_call.1} parent=1 // loop_pre_header
      _
    $region3: #{tpu_custom_call.1} parent=1 // loop_header
      %s16 = sphi 0, %s20
      %p17 = scmp.ge.s32.totalorder %s16, 4
      %s26 = sphi 0, %s28
      %s29 = sphi 0, %s26
      %s30 = sphi 0, %s29
      %s46 = sphi 0, %s30
      %s50 = sphi 0, %s50
      %s52 = sphi 0, %s50
      %s53 = sphi 0, %s52
      %s67 = sphi 0, %s53
      %s71 = sphi 0, %s71
      %s73 = sphi 0, %s71
      %s74 = sphi 0, %s73
      %s88 = sphi 0, %s74
      %s92 = sphi 0, %s92
      %s94 = sphi 0, %s92
      %s95 = sphi 0, %s94
      %s109 = sphi 0, %s95
      %s113 = sphi 0, %s113
      %s115 = sphi 0, %s113
      %s116 = sphi 0, %s115
      %s130 = sphi 0, %s116
      %s134 = sphi 0, %s134
      %s136 = sphi 0, %s134
      %s137 = sphi 0, %s136
      %s151 = sphi 0, %s137
      %s155 = sphi 0, %s155
      %s157 = sphi 0, %s155
      %s158 = sphi 0, %s157
      %s172 = sphi 0, %s158
      %s178 = sphi 0, %s180
      %s181 = sphi 0, %s178
      %s182 = sphi 0, %s181
      %s198 = sphi 0, %s182
    $region4: #{tpu_custom_call.1} parent=1 // loop_header_branch
      %19 = sbr.rel (%p17) target = $region8
    $region5: #{tpu_custom_call.1} parent=1 // loop_body
      %s21 = ssub.s32 %s16, 1
      %s22 = ssub.s32 %s16, 2
      %s23 = sadd.s32 %s16, 1
      %s24 = ssub.s32 %s16, %s23
      %p25 = scmp.eq.s32.totalorder %s24, 0
      %s27 = sadd.s32 %s26, 1
      %s28 = scalar_select %p25, %s26, %s27
      %p31 = pneg %p25
      %p32 = scmp.eq.s32.totalorder %s16, 1
      %p33 = por %p31, %p32
      %p34 = scmp.ne.s32.totalorder %s26, %s29
      %p35 = scmp.eq.s32.totalorder %s16, 0
      %p36 = por %p34, %p35
      %p37 = scmp.ne.s32.totalorder %s26, %s29
      %p38 = scmp.eq.s32.totalorder %s21, 1
      %p39 = por %p37, %p38
      %p40 = scmp.ne.s32.totalorder %s29, %s30
      %p41 = scmp.eq.s32.totalorder %s21, 0
      %p42 = por %p40, %p41
      %p43 = scmp.ne.s32.totalorder %s29, %s30
      %p44 = scmp.eq.s32.totalorder %s22, 1
      %p45 = por %p43, %p44
      %p47 = scmp.ne.s32.totalorder %s30, %s46
      %p48 = scmp.eq.s32.totalorder %s22, 0
      %p49 = por %p47, %p48
      %s51 = sadd.s32 %s50, 1
      %p54 = scmp.eq.s32.totalorder %s16, 1
      %p55 = scmp.ne.s32.totalorder %s50, %s52
      %p56 = scmp.eq.s32.totalorder %s16, 0
      %p57 = por %p55, %p56
      %p58 = scmp.ne.s32.totalorder %s50, %s52
      %p59 = scmp.eq.s32.totalorder %s21, 1
      %p60 = por %p58, %p59
      %p61 = scmp.ne.s32.totalorder %s52, %s53
      %p62 = scmp.eq.s32.totalorder %s21, 0
      %p63 = por %p61, %p62
      %p64 = scmp.ne.s32.totalorder %s52, %s53
      %p65 = scmp.eq.s32.totalorder %s22, 1
      %p66 = por %p64, %p65
      %p68 = scmp.ne.s32.totalorder %s53, %s67
      %p69 = scmp.eq.s32.totalorder %s22, 0
      %p70 = por %p68, %p69
      %s72 = sadd.s32 %s71, 1
      %p75 = scmp.eq.s32.totalorder %s16, 1
      %p76 = scmp.ne.s32.totalorder %s71, %s73
      %p77 = scmp.eq.s32.totalorder %s16, 0
      %p78 = por %p76, %p77
      %p79 = scmp.ne.s32.totalorder %s71, %s73
      %p80 = scmp.eq.s32.totalorder %s21, 1
      %p81 = por %p79, %p80
      %p82 = scmp.ne.s32.totalorder %s73, %s74
      %p83 = scmp.eq.s32.totalorder %s21, 0
      %p84 = por %p82, %p83
      %p85 = scmp.ne.s32.totalorder %s73, %s74
      %p86 = scmp.eq.s32.totalorder %s22, 1
      %p87 = por %p85, %p86
      %p89 = scmp.ne.s32.totalorder %s74, %s88
      %p90 = scmp.eq.s32.totalorder %s22, 0
      %p91 = por %p89, %p90
      %s93 = sadd.s32 %s92, 1
      %p96 = scmp.eq.s32.totalorder %s16, 1
      %p97 = scmp.ne.s32.totalorder %s92, %s94
      %p98 = scmp.eq.s32.totalorder %s16, 0
      %p99 = por %p97, %p98
      %p100 = scmp.ne.s32.totalorder %s92, %s94
      %p101 = scmp.eq.s32.totalorder %s21, 1
      %p102 = por %p100, %p101
      %p103 = scmp.ne.s32.totalorder %s94, %s95
      %p104 = scmp.eq.s32.totalorder %s21, 0
      %p105 = por %p103, %p104
      %p106 = scmp.ne.s32.totalorder %s94, %s95
      %p107 = scmp.eq.s32.totalorder %s22, 1
      %p108 = por %p106, %p107
      %p110 = scmp.ne.s32.totalorder %s95, %s109
      %p111 = scmp.eq.s32.totalorder %s22, 0
      %p112 = por %p110, %p111
      %s114 = sadd.s32 %s113, 1
      %p117 = scmp.eq.s32.totalorder %s16, 1
      %p118 = scmp.ne.s32.totalorder %s113, %s115
      %p119 = scmp.eq.s32.totalorder %s16, 0
      %p120 = por %p118, %p119
      %p121 = scmp.ne.s32.totalorder %s113, %s115
      %p122 = scmp.eq.s32.totalorder %s21, 1
      %p123 = por %p121, %p122
      %p124 = scmp.ne.s32.totalorder %s115, %s116
      %p125 = scmp.eq.s32.totalorder %s21, 0
      %p126 = por %p124, %p125
      %p127 = scmp.ne.s32.totalorder %s115, %s116
      %p128 = scmp.eq.s32.totalorder %s22, 1
      %p129 = por %p127, %p128
      %p131 = scmp.ne.s32.totalorder %s116, %s130
      %p132 = scmp.eq.s32.totalorder %s22, 0
      %p133 = por %p131, %p132
      %s135 = sadd.s32 %s134, 1
      %p138 = scmp.eq.s32.totalorder %s16, 1
      %p139 = scmp.ne.s32.totalorder %s134, %s136
      %p140 = scmp.eq.s32.totalorder %s16, 0
      %p141 = por %p139, %p140
      %p142 = scmp.ne.s32.totalorder %s134, %s136
      %p143 = scmp.eq.s32.totalorder %s21, 1
      %p144 = por %p142, %p143
      %p145 = scmp.ne.s32.totalorder %s136, %s137
      %p146 = scmp.eq.s32.totalorder %s21, 0
      %p147 = por %p145, %p146
      %p148 = scmp.ne.s32.totalorder %s136, %s137
      %p149 = scmp.eq.s32.totalorder %s22, 1
      %p150 = por %p148, %p149
      %p152 = scmp.ne.s32.totalorder %s137, %s151
      %p153 = scmp.eq.s32.totalorder %s22, 0
      %p154 = por %p152, %p153
      %s156 = sadd.s32 %s155, 1
      %p159 = scmp.eq.s32.totalorder %s16, 1
      %p160 = scmp.ne.s32.totalorder %s155, %s157
      %p161 = scmp.eq.s32.totalorder %s16, 0
      %p162 = por %p160, %p161
      %p163 = scmp.ne.s32.totalorder %s155, %s157
      %p164 = scmp.eq.s32.totalorder %s21, 1
      %p165 = por %p163, %p164
      %p166 = scmp.ne.s32.totalorder %s157, %s158
      %p167 = scmp.eq.s32.totalorder %s21, 0
      %p168 = por %p166, %p167
      %p169 = scmp.ne.s32.totalorder %s157, %s158
      %p170 = scmp.eq.s32.totalorder %s22, 1
      %p171 = por %p169, %p170
      %p173 = scmp.ne.s32.totalorder %s158, %s172
      %p174 = scmp.eq.s32.totalorder %s22, 0
      %p175 = por %p173, %p174
      %s176 = ssub.s32 %s16, %s23
      %p177 = scmp.eq.s32.totalorder %s176, 0
      %s179 = sadd.s32 %s178, 1
      %s180 = scalar_select %p177, %s178, %s179
      %p183 = pneg %p177
      %p184 = scmp.eq.s32.totalorder %s16, 1
      %p185 = por %p183, %p184
      %p186 = scmp.ne.s32.totalorder %s178, %s181
      %p187 = scmp.eq.s32.totalorder %s16, 0
      %p188 = por %p186, %p187
      %p189 = scmp.ne.s32.totalorder %s178, %s181
      %p190 = scmp.eq.s32.totalorder %s21, 1
      %p191 = por %p189, %p190
      %p192 = scmp.ne.s32.totalorder %s181, %s182
      %p193 = scmp.eq.s32.totalorder %s21, 0
      %p194 = por %p192, %p193
      %p195 = scmp.ne.s32.totalorder %s181, %s182
      %p196 = scmp.eq.s32.totalorder %s22, 1
      %p197 = por %p195, %p196
      %p199 = scmp.ne.s32.totalorder %s182, %s198
      %p200 = scmp.eq.s32.totalorder %s22, 0
      %p201 = por %p199, %p200
      %p202 = scmp.le.s32.totalorder 1, %s16
      %p203 = scmp.lt.s32.totalorder %s16, 3
      %p204 = pnand %p202, %p203
      %p205 = pneg %p204
      // Predicated region
      $region9: #{tpu_custom_call.1} parent=5 // pred_check
        _
      $region10: #{tpu_custom_call.1} parent=5 // pred_check_branch
        %207 = sbr.rel (%p204) target = $region12
      $region11: #{tpu_custom_call.1} parent=5 // pred_region
        %s208 = ssub.s32 %s16, 1
        // Predicated region
        $region13: #{tpu_custom_call.1} parent=11 // pred_check
          %p209 = pneg %p63
        $region14: #{tpu_custom_call.1} parent=11 // pred_check_branch
          %211 = sbr.rel (%p209) target = $region16
        $region15: #{tpu_custom_call.1} parent=11 // pred_region
          _
        $region16: #{tpu_custom_call.1} parent=11 // pred_fallthru
          _
        // Predicated region
        $region17: #{tpu_custom_call.1} parent=11 // pred_check
          %p212 = pneg %p84
        $region18: #{tpu_custom_call.1} parent=11 // pred_check_branch
          %214 = sbr.rel (%p212) target = $region20
        $region19: #{tpu_custom_call.1} parent=11 // pred_region
          _
        $region20: #{tpu_custom_call.1} parent=11 // pred_fallthru
          _
        // Predicated region
        $region21: #{tpu_custom_call.1} parent=11 // pred_check
          %p215 = pneg %p105
        $region22: #{tpu_custom_call.1} parent=11 // pred_check_branch
          %217 = sbr.rel (%p215) target = $region24
        $region23: #{tpu_custom_call.1} parent=11 // pred_region
          _
        $region24: #{tpu_custom_call.1} parent=11 // pred_fallthru
          _
        // Predicated region
        $region25: #{tpu_custom_call.1} parent=11 // pred_check
          %p218 = pneg %p126
        $region26: #{tpu_custom_call.1} parent=11 // pred_check_branch
          %220 = sbr.rel (%p218) target = $region28
        $region27: #{tpu_custom_call.1} parent=11 // pred_region
          _
        $region28: #{tpu_custom_call.1} parent=11 // pred_fallthru
          _
        // Predicated region
        $region29: #{tpu_custom_call.1} parent=11 // pred_check
          %p221 = pneg %p147
        $region30: #{tpu_custom_call.1} parent=11 // pred_check_branch
          %223 = sbr.rel (%p221) target = $region32
        $region31: #{tpu_custom_call.1} parent=11 // pred_region
          _
        $region32: #{tpu_custom_call.1} parent=11 // pred_fallthru
          _
        // Predicated region
        $region33: #{tpu_custom_call.1} parent=11 // pred_check
          %p224 = pneg %p168
        $region34: #{tpu_custom_call.1} parent=11 // pred_check_branch
          %226 = sbr.rel (%p224) target = $region36
        $region35: #{tpu_custom_call.1} parent=11 // pred_region
          _
        $region36: #{tpu_custom_call.1} parent=11 // pred_fallthru
          _
      $region12: #{tpu_custom_call.1} parent=5 // pred_fallthru
        _
      %p227 = scmp.lt.s32.totalorder %s16, 2
      // Predicated region
      $region37: #{tpu_custom_call.1} parent=5 // pred_check
        %p228 = pneg %p227
      $region38: #{tpu_custom_call.1} parent=5 // pred_check_branch
        %230 = sbr.rel (%p228) target = $region40
      $region39: #{tpu_custom_call.1} parent=5 // pred_region
        // Predicated region
        $region41: #{tpu_custom_call.1} parent=39 // pred_check
          %p231 = pneg %p36
        $region42: #{tpu_custom_call.1} parent=39 // pred_check_branch
          %233 = sbr.rel (%p231) target = $region44
        $region43: #{tpu_custom_call.1} parent=39 // pred_region
          %p234 = scmp.lt.s32.totalorder %s16, 1
          %s235 = scalar_select %p234, %s16, 1
          %s236 = smul.addr %s235, 2
          %s237 = smul.addr %s236, 4
          %s238 = scalar_lea.vmem %s0, %s237
        $region44: #{tpu_custom_call.1} parent=39 // pred_fallthru
          _
      $region40: #{tpu_custom_call.1} parent=5 // pred_fallthru
        _
      %p239 = scmp.le.s32.totalorder 1, %s16
      %p240 = scmp.lt.s32.totalorder %s16, 3
      %p241 = pnand %p239, %p240
      %p242 = pneg %p241
      // Predicated region
      $region45: #{tpu_custom_call.1} parent=5 // pred_check
        _
      $region46: #{tpu_custom_call.1} parent=5 // pred_check_branch
        %244 = sbr.rel (%p241) target = $region48
      $region47: #{tpu_custom_call.1} parent=5 // pred_region
        %s245 = ssub.s32 %s16, 1
        %p246 = scmp.lt.s32.totalorder %s21, 1
        %s247 = scalar_select %p246, %s21, 1
        %s248 = smul.addr %s247, 2
        %s249 = smul.addr %s248, 4
        %s250 = scalar_lea.vmem %s0, %s249
        %p251 = pneg %p42
        %p252 = pneg %p39
        %p253 = pneg %p63
        %p254 = pneg %p60
        %p255 = pneg %p84
        %p256 = pneg %p81
        %p257 = pneg %p105
        %p258 = pneg %p102
        %p259 = pneg %p126
        %p260 = pneg %p123
        %p261 = pneg %p147
        %p262 = pneg %p144
        %p263 = pneg %p168
        %p264 = pneg %p165
        %p265 = pneg %p194
        %p266 = pneg %p191
        %s267 = sand.u32 %s181, 1
        %s268 = scalar_lea.sflag [#allocation3], %s267
        %s269 = sand.u32 %s181, 1
        %s270 = smul.addr %s269, 2
        %s271 = scalar_lea.vmem [#allocation2], %s270
        %p272 = scmp.lt.s32.totalorder %s21, 1
        %s273 = scalar_select %p272, %s21, 1
        %s274 = smul.addr %s273, 2
        %s275 = smul.addr %s274, 4
        %s276 = scalar_lea.vmem %s0, %s275
        %v277 = vld [vmem:[%s276] sm:$0xff]
        %v278 = vld [vmem:[%s2] sm:$0xff]
        %280 = vset.pattern.permute.xlu0 0
        %281 = vperm.xlu0 %280, %v278
        %v282 = vpop.permute.xlu0 %281
        %v284 = vld [vmem:[%s1] sm:$0xff]
        %v286 = vcombine.high %v277, %v277
        %vm287 = vcmask 31744
        %v289 = vsel %vm287, %v284, 0
        %vm291 = vcmask 1043456
        %v292 = vsel %vm291, %v277, 0
        %v294 = vsel %vm291, %v286, 0
        %296 = vmatprep.subr.mxu0 %v294
        %297 = vmatpush1.msra.mxu0 %v292
        %298 = vmatprep.subr.mxu0 0.0
        %299 = vmatpush1.msra.mxu0 0.0
        %300 = vmatprep.subr.mxu0 0.0
        %301 = vmatpush1.msra.mxu0 0.0
        %302 = vmatprep.subr.mxu0 0.0
        %303 = vmatpush1.msra.mxu0 0.0
        %304 = vmatprep.subr.mxu0 0.0
        %305 = vmatpush1.msra.mxu0 0.0
        %306 = vmatprep.subr.mxu0 0.0
        %307 = vmatpush1.msra.mxu0 0.0
        %308 = vmatprep.subr.mxu0 0.0
        %309 = vmatpush1.msra.mxu0 0.0
        %310 = vmatprep.subr.mxu0 0.0
        %311 = vmatpush1.msra.mxu0 0.0
        %312 = vmatprep.subr.mxu0 0.0
        %313 = vmatpush1.msra.mxu0 0.0
        %314 = vmatprep.subr.mxu0 0.0
        %315 = vmatpush1.msra.mxu0 0.0
        %316 = vmatprep.subr.mxu0 0.0
        %317 = vmatpush1.msra.mxu0 0.0
        %318 = vmatprep.subr.mxu0 0.0
        %319 = vmatpush1.msra.mxu0 0.0
        %320 = vmatprep.subr.mxu0 0.0
        %321 = vmatpush1.msra.mxu0 0.0
        %322 = vmatprep.subr.mxu0 0.0
        %323 = vmatpush1.msra.mxu0 0.0
        %324 = vmatprep.subr.mxu0 0.0
        %325 = vmatpush1.msra.mxu0 0.0
        %326 = vmatprep.subr.mxu0 0.0
        %327 = vmatpush1.msra.mxu0 0.0
        %328 = vmatprep.subr.mxu0 0.0
        %329 = vmatpush1.msra.mxu0 0.0
        %330 = vmatprep.subr.mxu0 0.0
        %331 = vmatpush1.msra.mxu0 0.0
        %332 = vmatprep.subr.mxu0 0.0
        %333 = vmatpush1.msra.mxu0 0.0
        %334 = vmatprep.subr.mxu0 0.0
        %335 = vmatpush1.msra.mxu0 0.0
        %336 = vmatprep.subr.mxu0 0.0
        %337 = vmatpush1.msra.mxu0 0.0
        %338 = vmatprep.subr.mxu0 0.0
        %339 = vmatpush1.msra.mxu0 0.0
        %340 = vmatprep.subr.mxu0 0.0
        %341 = vmatpush1.msra.mxu0 0.0
        %342 = vmatprep.subr.mxu0 0.0
        %343 = vmatpush1.msra.mxu0 0.0
        %344 = vmatprep.subr.mxu0 0.0
        %345 = vmatpush1.msra.mxu0 0.0
        %346 = vmatprep.subr.mxu0 0.0
        %347 = vmatpush1.msra.mxu0 0.0
        %348 = vmatprep.subr.mxu0 0.0
        %349 = vmatpush1.msra.mxu0 0.0
        %350 = vmatprep.subr.mxu0 0.0
        %351 = vmatpush1.msra.mxu0 0.0
        %352 = vmatprep.subr.mxu0 0.0
        %353 = vmatpush1.msra.mxu0 0.0
        %354 = vmatprep.subr.mxu0 0.0
        %355 = vmatpush1.msra.mxu0 0.0
        %356 = vmatprep.subr.mxu0 0.0
        %357 = vmatpush1.msra.mxu0 0.0
        %358 = vmatprep.subr.mxu0 0.0
        %359 = vmatpush1.msra.mxu0 0.0
        %360 = vmatprep.mubr.f32.mxu0 0.0
        %361 = vmatmul.mubr.f32.gmra.mrb[0].mxu0 %v289
        %v362 = vpop.f32.mrb[0].mxu0
        %v363 = vadd.f32 0.0, %v362
        %v364 = vpop.f32.mrb[0].mxu0
        %v365 = vadd.f32 0.0, %v364
        %366 = vdwg.mxu0
        %v367 = vadd.f32 %v282, %v363
        %v368 = vadd.f32 %v282, %v365
        %370 = vrot.lane.b32.xlu0 %v277, 127
        %v371 = vpop.permute.xlu0 %370
        %372 = vrot.lane.b32.xlu0 %v286, 127
        %v373 = vpop.permute.xlu0 %372
        %v374 = vlaneseq
        %v375 = vand.u32 %v374, 127
        %vm376 = vcmp.lt.s32.totalorder %v375, 127
        %v377 = vsel %vm376, %v371, %v373
        %v378 = vsel %vm376, %v373, %v371
        %s379 = scalar_lea.vmem %s1, 8
        %v380 = vld [vmem:[%s379] sm:$0xff]
        %v382 = vsel %vm287, %v380, 0
        %v385 = vsel %vm291, %v377, 0
        %v388 = vsel %vm291, %v378, 0
        %390 = vmatprep.subr.mxu0 %v388
        %391 = vmatpush1.msra.mxu0 %v385
        %392 = vmatprep.subr.mxu0 0.0
        %393 = vmatpush1.msra.mxu0 0.0
        %394 = vmatprep.subr.mxu0 0.0
        %395 = vmatpush1.msra.mxu0 0.0
        %396 = vmatprep.subr.mxu0 0.0
        %397 = vmatpush1.msra.mxu0 0.0
        %398 = vmatprep.subr.mxu0 0.0
        %399 = vmatpush1.msra.mxu0 0.0
        %400 = vmatprep.subr.mxu0 0.0
        %401 = vmatpush1.msra.mxu0 0.0
        %402 = vmatprep.subr.mxu0 0.0
        %403 = vmatpush1.msra.mxu0 0.0
        %404 = vmatprep.subr.mxu0 0.0
        %405 = vmatpush1.msra.mxu0 0.0
        %406 = vmatprep.subr.mxu0 0.0
        %407 = vmatpush1.msra.mxu0 0.0
        %408 = vmatprep.subr.mxu0 0.0
        %409 = vmatpush1.msra.mxu0 0.0
        %410 = vmatprep.subr.mxu0 0.0
        %411 = vmatpush1.msra.mxu0 0.0
        %412 = vmatprep.subr.mxu0 0.0
        %413 = vmatpush1.msra.mxu0 0.0
        %414 = vmatprep.subr.mxu0 0.0
        %415 = vmatpush1.msra.mxu0 0.0
        %416 = vmatprep.subr.mxu0 0.0
        %417 = vmatpush1.msra.mxu0 0.0
        %418 = vmatprep.subr.mxu0 0.0
        %419 = vmatpush1.msra.mxu0 0.0
        %420 = vmatprep.subr.mxu0 0.0
        %421 = vmatpush1.msra.mxu0 0.0
        %422 = vmatprep.subr.mxu0 0.0
        %423 = vmatpush1.msra.mxu0 0.0
        %424 = vmatprep.subr.mxu0 0.0
        %425 = vmatpush1.msra.mxu0 0.0
        %426 = vmatprep.subr.mxu0 0.0
        %427 = vmatpush1.msra.mxu0 0.0
        %428 = vmatprep.subr.mxu0 0.0
        %429 = vmatpush1.msra.mxu0 0.0
        %430 = vmatprep.subr.mxu0 0.0
        %431 = vmatpush1.msra.mxu0 0.0
        %432 = vmatprep.subr.mxu0 0.0
        %433 = vmatpush1.msra.mxu0 0.0
        %434 = vmatprep.subr.mxu0 0.0
        %435 = vmatpush1.msra.mxu0 0.0
        %436 = vmatprep.subr.mxu0 0.0
        %437 = vmatpush1.msra.mxu0 0.0
        %438 = vmatprep.subr.mxu0 0.0
        %439 = vmatpush1.msra.mxu0 0.0
        %440 = vmatprep.subr.mxu0 0.0
        %441 = vmatpush1.msra.mxu0 0.0
        %442 = vmatprep.subr.mxu0 0.0
        %443 = vmatpush1.msra.mxu0 0.0
        %444 = vmatprep.subr.mxu0 0.0
        %445 = vmatpush1.msra.mxu0 0.0
        %446 = vmatprep.subr.mxu0 0.0
        %447 = vmatpush1.msra.mxu0 0.0
        %448 = vmatprep.subr.mxu0 0.0
        %449 = vmatpush1.msra.mxu0 0.0
        %450 = vmatprep.subr.mxu0 0.0
        %451 = vmatpush1.msra.mxu0 0.0
        %452 = vmatprep.subr.mxu0 0.0
        %453 = vmatpush1.msra.mxu0 0.0
        %454 = vmatprep.mubr.f32.mxu0 0.0
        %455 = vmatmul.mubr.f32.gmra.mrb[0].mxu0 %v382
        %v456 = vpop.f32.mrb[0].mxu0
        %v457 = vadd.f32 0.0, %v456
        %v458 = vpop.f32.mrb[0].mxu0
        %v459 = vadd.f32 0.0, %v458
        %460 = vdwg.mxu0
        %v461 = vadd.f32 %v367, %v457
        %v462 = vadd.f32 %v368, %v459
        %463 = vrot.lane.b32.xlu0 %v277, 126
        %v464 = vpop.permute.xlu0 %463
        %465 = vrot.lane.b32.xlu0 %v286, 126
        %v466 = vpop.permute.xlu0 %465
        %vm467 = vcmp.lt.s32.totalorder %v375, 126
        %v468 = vsel %vm467, %v464, %v466
        %v469 = vsel %vm467, %v466, %v464
        %s470 = scalar_lea.vmem %s1, 16
        %v471 = vld [vmem:[%s470] sm:$0xff]
        %v473 = vsel %vm287, %v471, 0
        %v476 = vsel %vm291, %v468, 0
        %v479 = vsel %vm291, %v469, 0
        %481 = vmatprep.subr.mxu0 %v479
        %482 = vmatpush1.msra.mxu0 %v476
        %483 = vmatprep.subr.mxu0 0.0
        %484 = vmatpush1.msra.mxu0 0.0
        %485 = vmatprep.subr.mxu0 0.0
        %486 = vmatpush1.msra.mxu0 0.0
        %487 = vmatprep.subr.mxu0 0.0
        %488 = vmatpush1.msra.mxu0 0.0
        %489 = vmatprep.subr.mxu0 0.0
        %490 = vmatpush1.msra.mxu0 0.0
        %491 = vmatprep.subr.mxu0 0.0
        %492 = vmatpush1.msra.mxu0 0.0
        %493 = vmatprep.subr.mxu0 0.0
        %494 = vmatpush1.msra.mxu0 0.0
        %495 = vmatprep.subr.mxu0 0.0
        %496 = vmatpush1.msra.mxu0 0.0
        %497 = vmatprep.subr.mxu0 0.0
        %498 = vmatpush1.msra.mxu0 0.0
        %499 = vmatprep.subr.mxu0 0.0
        %500 = vmatpush1.msra.mxu0 0.0
        %501 = vmatprep.subr.mxu0 0.0
        %502 = vmatpush1.msra.mxu0 0.0
        %503 = vmatprep.subr.mxu0 0.0
        %504 = vmatpush1.msra.mxu0 0.0
        %505 = vmatprep.subr.mxu0 0.0
        %506 = vmatpush1.msra.mxu0 0.0
        %507 = vmatprep.subr.mxu0 0.0
        %508 = vmatpush1.msra.mxu0 0.0
        %509 = vmatprep.subr.mxu0 0.0
        %510 = vmatpush1.msra.mxu0 0.0
        %511 = vmatprep.subr.mxu0 0.0
        %512 = vmatpush1.msra.mxu0 0.0
        %513 = vmatprep.subr.mxu0 0.0
        %514 = vmatpush1.msra.mxu0 0.0
        %515 = vmatprep.subr.mxu0 0.0
        %516 = vmatpush1.msra.mxu0 0.0
        %517 = vmatprep.subr.mxu0 0.0
        %518 = vmatpush1.msra.mxu0 0.0
        %519 = vmatprep.subr.mxu0 0.0
        %520 = vmatpush1.msra.mxu0 0.0
        %521 = vmatprep.subr.mxu0 0.0
        %522 = vmatpush1.msra.mxu0 0.0
        %523 = vmatprep.subr.mxu0 0.0
        %524 = vmatpush1.msra.mxu0 0.0
        %525 = vmatprep.subr.mxu0 0.0
        %526 = vmatpush1.msra.mxu0 0.0
        %527 = vmatprep.subr.mxu0 0.0
        %528 = vmatpush1.msra.mxu0 0.0
        %529 = vmatprep.subr.mxu0 0.0
        %530 = vmatpush1.msra.mxu0 0.0
        %531 = vmatprep.subr.mxu0 0.0
        %532 = vmatpush1.msra.mxu0 0.0
        %533 = vmatprep.subr.mxu0 0.0
        %534 = vmatpush1.msra.mxu0 0.0
        %535 = vmatprep.subr.mxu0 0.0
        %536 = vmatpush1.msra.mxu0 0.0
        %537 = vmatprep.subr.mxu0 0.0
        %538 = vmatpush1.msra.mxu0 0.0
        %539 = vmatprep.subr.mxu0 0.0
        %540 = vmatpush1.msra.mxu0 0.0
        %541 = vmatprep.subr.mxu0 0.0
        %542 = vmatpush1.msra.mxu0 0.0
        %543 = vmatprep.subr.mxu0 0.0
        %544 = vmatpush1.msra.mxu0 0.0
        %545 = vmatprep.mubr.f32.mxu0 0.0
        %546 = vmatmul.mubr.f32.gmra.mrb[0].mxu0 %v473
        %v547 = vpop.f32.mrb[0].mxu0
        %v548 = vadd.f32 0.0, %v547
        %v549 = vpop.f32.mrb[0].mxu0
        %v550 = vadd.f32 0.0, %v549
        %551 = vdwg.mxu0
        %v552 = vadd.f32 %v461, %v548
        %v553 = vadd.f32 %v462, %v550
        %554 = vrot.lane.b32.xlu0 %v277, 112
        %v555 = vpop.permute.xlu0 %554
        %556 = vrot.lane.b32.xlu0 %v286, 112
        %v557 = vpop.permute.xlu0 %556
        %vm558 = vcmp.lt.s32.totalorder %v375, 112
        %v559 = vsel %vm558, %v555, %v557
        %v560 = vsel %vm558, %v557, %v555
        %s561 = scalar_lea.vmem %s1, 24
        %v562 = vld [vmem:[%s561] sm:$0xff]
        %v564 = vsel %vm287, %v562, 0
        %v567 = vsel %vm291, %v559, 0
        %v570 = vsel %vm291, %v560, 0
        %572 = vmatprep.subr.mxu0 %v570
        %573 = vmatpush1.msra.mxu0 %v567
        %574 = vmatprep.subr.mxu0 0.0
        %575 = vmatpush1.msra.mxu0 0.0
        %576 = vmatprep.subr.mxu0 0.0
        %577 = vmatpush1.msra.mxu0 0.0
        %578 = vmatprep.subr.mxu0 0.0
        %579 = vmatpush1.msra.mxu0 0.0
        %580 = vmatprep.subr.mxu0 0.0
        %581 = vmatpush1.msra.mxu0 0.0
        %582 = vmatprep.subr.mxu0 0.0
        %583 = vmatpush1.msra.mxu0 0.0
        %584 = vmatprep.subr.mxu0 0.0
        %585 = vmatpush1.msra.mxu0 0.0
        %586 = vmatprep.subr.mxu0 0.0
        %587 = vmatpush1.msra.mxu0 0.0
        %588 = vmatprep.subr.mxu0 0.0
        %589 = vmatpush1.msra.mxu0 0.0
        %590 = vmatprep.subr.mxu0 0.0
        %591 = vmatpush1.msra.mxu0 0.0
        %592 = vmatprep.subr.mxu0 0.0
        %593 = vmatpush1.msra.mxu0 0.0
        %594 = vmatprep.subr.mxu0 0.0
        %595 = vmatpush1.msra.mxu0 0.0
        %596 = vmatprep.subr.mxu0 0.0
        %597 = vmatpush1.msra.mxu0 0.0
        %598 = vmatprep.subr.mxu0 0.0
        %599 = vmatpush1.msra.mxu0 0.0
        %600 = vmatprep.subr.mxu0 0.0
        %601 = vmatpush1.msra.mxu0 0.0
        %602 = vmatprep.subr.mxu0 0.0
        %603 = vmatpush1.msra.mxu0 0.0
        %604 = vmatprep.subr.mxu0 0.0
        %605 = vmatpush1.msra.mxu0 0.0
        %606 = vmatprep.subr.mxu0 0.0
        %607 = vmatpush1.msra.mxu0 0.0
        %608 = vmatprep.subr.mxu0 0.0
        %609 = vmatpush1.msra.mxu0 0.0
        %610 = vmatprep.subr.mxu0 0.0
        %611 = vmatpush1.msra.mxu0 0.0
        %612 = vmatprep.subr.mxu0 0.0
        %613 = vmatpush1.msra.mxu0 0.0
        %614 = vmatprep.subr.mxu0 0.0
        %615 = vmatpush1.msra.mxu0 0.0
        %616 = vmatprep.subr.mxu0 0.0
        %617 = vmatpush1.msra.mxu0 0.0
        %618 = vmatprep.subr.mxu0 0.0
        %619 = vmatpush1.msra.mxu0 0.0
        %620 = vmatprep.subr.mxu0 0.0
        %621 = vmatpush1.msra.mxu0 0.0
        %622 = vmatprep.subr.mxu0 0.0
        %623 = vmatpush1.msra.mxu0 0.0
        %624 = vmatprep.subr.mxu0 0.0
        %625 = vmatpush1.msra.mxu0 0.0
        %626 = vmatprep.subr.mxu0 0.0
        %627 = vmatpush1.msra.mxu0 0.0
        %628 = vmatprep.subr.mxu0 0.0
        %629 = vmatpush1.msra.mxu0 0.0
        %630 = vmatprep.subr.mxu0 0.0
        %631 = vmatpush1.msra.mxu0 0.0
        %632 = vmatprep.subr.mxu0 0.0
        %633 = vmatpush1.msra.mxu0 0.0
        %634 = vmatprep.subr.mxu0 0.0
        %635 = vmatpush1.msra.mxu0 0.0
        %636 = vmatprep.mubr.f32.mxu0 0.0
        %637 = vmatmul.mubr.f32.gmra.mrb[0].mxu0 %v564
        %v638 = vpop.f32.mrb[0].mxu0
        %v639 = vadd.f32 0.0, %v638
        %v640 = vpop.f32.mrb[0].mxu0
        %v641 = vadd.f32 0.0, %v640
        %642 = vdwg.mxu0
        %v643 = vadd.f32 %v552, %v639
        %v644 = vadd.f32 %v553, %v641
        %645 = vrot.lane.b32.xlu0 %v277, 111
        %v646 = vpop.permute.xlu0 %645
        %647 = vrot.lane.b32.xlu0 %v286, 111
        %v648 = vpop.permute.xlu0 %647
        %vm649 = vcmp.lt.s32.totalorder %v375, 111
        %v650 = vsel %vm649, %v646, %v648
        %v651 = vsel %vm649, %v648, %v646
        %s652 = scalar_lea.vmem %s1, 32
        %v653 = vld [vmem:[%s652] sm:$0xff]
        %v655 = vsel %vm287, %v653, 0
        %v658 = vsel %vm291, %v650, 0
        %v661 = vsel %vm291, %v651, 0
        %663 = vmatprep.subr.mxu0 %v661
        %664 = vmatpush1.msra.mxu0 %v658
        %665 = vmatprep.subr.mxu0 0.0
        %666 = vmatpush1.msra.mxu0 0.0
        %667 = vmatprep.subr.mxu0 0.0
        %668 = vmatpush1.msra.mxu0 0.0
        %669 = vmatprep.subr.mxu0 0.0
        %670 = vmatpush1.msra.mxu0 0.0
        %671 = vmatprep.subr.mxu0 0.0
        %672 = vmatpush1.msra.mxu0 0.0
        %673 = vmatprep.subr.mxu0 0.0
        %674 = vmatpush1.msra.mxu0 0.0
        %675 = vmatprep.subr.mxu0 0.0
        %676 = vmatpush1.msra.mxu0 0.0
        %677 = vmatprep.subr.mxu0 0.0
        %678 = vmatpush1.msra.mxu0 0.0
        %679 = vmatprep.subr.mxu0 0.0
        %680 = vmatpush1.msra.mxu0 0.0
        %681 = vmatprep.subr.mxu0 0.0
        %682 = vmatpush1.msra.mxu0 0.0
        %683 = vmatprep.subr.mxu0 0.0
        %684 = vmatpush1.msra.mxu0 0.0
        %685 = vmatprep.subr.mxu0 0.0
        %686 = vmatpush1.msra.mxu0 0.0
        %687 = vmatprep.subr.mxu0 0.0
        %688 = vmatpush1.msra.mxu0 0.0
        %689 = vmatprep.subr.mxu0 0.0
        %690 = vmatpush1.msra.mxu0 0.0
        %691 = vmatprep.subr.mxu0 0.0
        %692 = vmatpush1.msra.mxu0 0.0
        %693 = vmatprep.subr.mxu0 0.0
        %694 = vmatpush1.msra.mxu0 0.0
        %695 = vmatprep.subr.mxu0 0.0
        %696 = vmatpush1.msra.mxu0 0.0
        %697 = vmatprep.subr.mxu0 0.0
        %698 = vmatpush1.msra.mxu0 0.0
        %699 = vmatprep.subr.mxu0 0.0
        %700 = vmatpush1.msra.mxu0 0.0
        %701 = vmatprep.subr.mxu0 0.0
        %702 = vmatpush1.msra.mxu0 0.0
        %703 = vmatprep.subr.mxu0 0.0
        %704 = vmatpush1.msra.mxu0 0.0
        %705 = vmatprep.subr.mxu0 0.0
        %706 = vmatpush1.msra.mxu0 0.0
        %707 = vmatprep.subr.mxu0 0.0
        %708 = vmatpush1.msra.mxu0 0.0
        %709 = vmatprep.subr.mxu0 0.0
        %710 = vmatpush1.msra.mxu0 0.0
        %711 = vmatprep.subr.mxu0 0.0
        %712 = vmatpush1.msra.mxu0 0.0
        %713 = vmatprep.subr.mxu0 0.0
        %714 = vmatpush1.msra.mxu0 0.0
        %715 = vmatprep.subr.mxu0 0.0
        %716 = vmatpush1.msra.mxu0 0.0
        %717 = vmatprep.subr.mxu0 0.0
        %718 = vmatpush1.msra.mxu0 0.0
        %719 = vmatprep.subr.mxu0 0.0
        %720 = vmatpush1.msra.mxu0 0.0
        %721 = vmatprep.subr.mxu0 0.0
        %722 = vmatpush1.msra.mxu0 0.0
        %723 = vmatprep.subr.mxu0 0.0
        %724 = vmatpush1.msra.mxu0 0.0
        %725 = vmatprep.subr.mxu0 0.0
        %726 = vmatpush1.msra.mxu0 0.0
        %727 = vmatprep.mubr.f32.mxu0 0.0
        %728 = vmatmul.mubr.f32.gmra.mrb[0].mxu0 %v655
        %v729 = vpop.f32.mrb[0].mxu0
        %v730 = vadd.f32 0.0, %v729
        %v731 = vpop.f32.mrb[0].mxu0
        %v732 = vadd.f32 0.0, %v731
        %733 = vdwg.mxu0
        %v734 = vadd.f32 %v643, %v730
        %v735 = vadd.f32 %v644, %v732
        %736 = vrot.lane.b32.xlu0 %v277, 110
        %v737 = vpop.permute.xlu0 %736
        %738 = vrot.lane.b32.xlu0 %v286, 110
        %v739 = vpop.permute.xlu0 %738
        %vm740 = vcmp.lt.s32.totalorder %v375, 110
        %v741 = vsel %vm740, %v737, %v739
        %v742 = vsel %vm740, %v739, %v737
        %s743 = scalar_lea.vmem %s1, 40
        %v744 = vld [vmem:[%s743] sm:$0xff]
        %v746 = vsel %vm287, %v744, 0
        %v749 = vsel %vm291, %v741, 0
        %v752 = vsel %vm291, %v742, 0
        %754 = vmatprep.subr.mxu0 %v752
        %755 = vmatpush1.msra.mxu0 %v749
        %756 = vmatprep.subr.mxu0 0.0
        %757 = vmatpush1.msra.mxu0 0.0
        %758 = vmatprep.subr.mxu0 0.0
        %759 = vmatpush1.msra.mxu0 0.0
        %760 = vmatprep.subr.mxu0 0.0
        %761 = vmatpush1.msra.mxu0 0.0
        %762 = vmatprep.subr.mxu0 0.0
        %763 = vmatpush1.msra.mxu0 0.0
        %764 = vmatprep.subr.mxu0 0.0
        %765 = vmatpush1.msra.mxu0 0.0
        %766 = vmatprep.subr.mxu0 0.0
        %767 = vmatpush1.msra.mxu0 0.0
        %768 = vmatprep.subr.mxu0 0.0
        %769 = vmatpush1.msra.mxu0 0.0
        %770 = vmatprep.subr.mxu0 0.0
        %771 = vmatpush1.msra.mxu0 0.0
        %772 = vmatprep.subr.mxu0 0.0
        %773 = vmatpush1.msra.mxu0 0.0
        %774 = vmatprep.subr.mxu0 0.0
        %775 = vmatpush1.msra.mxu0 0.0
        %776 = vmatprep.subr.mxu0 0.0
        %777 = vmatpush1.msra.mxu0 0.0
        %778 = vmatprep.subr.mxu0 0.0
        %779 = vmatpush1.msra.mxu0 0.0
        %780 = vmatprep.subr.mxu0 0.0
        %781 = vmatpush1.msra.mxu0 0.0
        %782 = vmatprep.subr.mxu0 0.0
        %783 = vmatpush1.msra.mxu0 0.0
        %784 = vmatprep.subr.mxu0 0.0
        %785 = vmatpush1.msra.mxu0 0.0
        %786 = vmatprep.subr.mxu0 0.0
        %787 = vmatpush1.msra.mxu0 0.0
        %788 = vmatprep.subr.mxu0 0.0
        %789 = vmatpush1.msra.mxu0 0.0
        %790 = vmatprep.subr.mxu0 0.0
        %791 = vmatpush1.msra.mxu0 0.0
        %792 = vmatprep.subr.mxu0 0.0
        %793 = vmatpush1.msra.mxu0 0.0
        %794 = vmatprep.subr.mxu0 0.0
        %795 = vmatpush1.msra.mxu0 0.0
        %796 = vmatprep.subr.mxu0 0.0
        %797 = vmatpush1.msra.mxu0 0.0
        %798 = vmatprep.subr.mxu0 0.0
        %799 = vmatpush1.msra.mxu0 0.0
        %800 = vmatprep.subr.mxu0 0.0
        %801 = vmatpush1.msra.mxu0 0.0
        %802 = vmatprep.subr.mxu0 0.0
        %803 = vmatpush1.msra.mxu0 0.0
        %804 = vmatprep.subr.mxu0 0.0
        %805 = vmatpush1.msra.mxu0 0.0
        %806 = vmatprep.subr.mxu0 0.0
        %807 = vmatpush1.msra.mxu0 0.0
        %808 = vmatprep.subr.mxu0 0.0
        %809 = vmatpush1.msra.mxu0 0.0
        %810 = vmatprep.subr.mxu0 0.0
        %811 = vmatpush1.msra.mxu0 0.0
        %812 = vmatprep.subr.mxu0 0.0
        %813 = vmatpush1.msra.mxu0 0.0
        %814 = vmatprep.subr.mxu0 0.0
        %815 = vmatpush1.msra.mxu0 0.0
        %816 = vmatprep.subr.mxu0 0.0
        %817 = vmatpush1.msra.mxu0 0.0
        %818 = vmatprep.mubr.f32.mxu0 0.0
        %819 = vmatmul.mubr.f32.gmra.mrb[0].mxu0 %v746
        %v820 = vpop.f32.mrb[0].mxu0
        %v821 = vadd.f32 0.0, %v820
        %v822 = vpop.f32.mrb[0].mxu0
        %v823 = vadd.f32 0.0, %v822
        %824 = vdwg.mxu0
        %v825 = vadd.f32 %v734, %v821
        %v826 = vadd.f32 %v735, %v823
        %827 = vrot.lane.b32.xlu0 %v277, 96
        %v828 = vpop.permute.xlu0 %827
        %829 = vrot.lane.b32.xlu0 %v286, 96
        %v830 = vpop.permute.xlu0 %829
        %vm831 = vcmp.lt.s32.totalorder %v375, 96
        %v832 = vsel %vm831, %v828, %v830
        %v833 = vsel %vm831, %v830, %v828
        %s834 = scalar_lea.vmem %s1, 48
        %v835 = vld [vmem:[%s834] sm:$0xff]
        %v837 = vsel %vm287, %v835, 0
        %v840 = vsel %vm291, %v832, 0
        %v843 = vsel %vm291, %v833, 0
        %845 = vmatprep.subr.mxu0 %v843
        %846 = vmatpush1.msra.mxu0 %v840
        %847 = vmatprep.subr.mxu0 0.0
        %848 = vmatpush1.msra.mxu0 0.0
        %849 = vmatprep.subr.mxu0 0.0
        %850 = vmatpush1.msra.mxu0 0.0
        %851 = vmatprep.subr.mxu0 0.0
        %852 = vmatpush1.msra.mxu0 0.0
        %853 = vmatprep.subr.mxu0 0.0
        %854 = vmatpush1.msra.mxu0 0.0
        %855 = vmatprep.subr.mxu0 0.0
        %856 = vmatpush1.msra.mxu0 0.0
        %857 = vmatprep.subr.mxu0 0.0
        %858 = vmatpush1.msra.mxu0 0.0
        %859 = vmatprep.subr.mxu0 0.0
        %860 = vmatpush1.msra.mxu0 0.0
        %861 = vmatprep.subr.mxu0 0.0
        %862 = vmatpush1.msra.mxu0 0.0
        %863 = vmatprep.subr.mxu0 0.0
        %864 = vmatpush1.msra.mxu0 0.0
        %865 = vmatprep.subr.mxu0 0.0
        %866 = vmatpush1.msra.mxu0 0.0
        %867 = vmatprep.subr.mxu0 0.0
        %868 = vmatpush1.msra.mxu0 0.0
        %869 = vmatprep.subr.mxu0 0.0
        %870 = vmatpush1.msra.mxu0 0.0
        %871 = vmatprep.subr.mxu0 0.0
        %872 = vmatpush1.msra.mxu0 0.0
        %873 = vmatprep.subr.mxu0 0.0
        %874 = vmatpush1.msra.mxu0 0.0
        %875 = vmatprep.subr.mxu0 0.0
        %876 = vmatpush1.msra.mxu0 0.0
        %877 = vmatprep.subr.mxu0 0.0
        %878 = vmatpush1.msra.mxu0 0.0
        %879 = vmatprep.subr.mxu0 0.0
        %880 = vmatpush1.msra.mxu0 0.0
        %881 = vmatprep.subr.mxu0 0.0
        %882 = vmatpush1.msra.mxu0 0.0
        %883 = vmatprep.subr.mxu0 0.0
        %884 = vmatpush1.msra.mxu0 0.0
        %885 = vmatprep.subr.mxu0 0.0
        %886 = vmatpush1.msra.mxu0 0.0
        %887 = vmatprep.subr.mxu0 0.0
        %888 = vmatpush1.msra.mxu0 0.0
        %889 = vmatprep.subr.mxu0 0.0
        %890 = vmatpush1.msra.mxu0 0.0
        %891 = vmatprep.subr.mxu0 0.0
        %892 = vmatpush1.msra.mxu0 0.0
        %893 = vmatprep.subr.mxu0 0.0
        %894 = vmatpush1.msra.mxu0 0.0
        %895 = vmatprep.subr.mxu0 0.0
        %896 = vmatpush1.msra.mxu0 0.0
        %897 = vmatprep.subr.mxu0 0.0
        %898 = vmatpush1.msra.mxu0 0.0
        %899 = vmatprep.subr.mxu0 0.0
        %900 = vmatpush1.msra.mxu0 0.0
        %901 = vmatprep.subr.mxu0 0.0
        %902 = vmatpush1.msra.mxu0 0.0
        %903 = vmatprep.subr.mxu0 0.0
        %904 = vmatpush1.msra.mxu0 0.0
        %905 = vmatprep.subr.mxu0 0.0
        %906 = vmatpush1.msra.mxu0 0.0
        %907 = vmatprep.subr.mxu0 0.0
        %908 = vmatpush1.msra.mxu0 0.0
        %909 = vmatprep.mubr.f32.mxu0 0.0
        %910 = vmatmul.mubr.f32.gmra.mrb[0].mxu0 %v837
        %v911 = vpop.f32.mrb[0].mxu0
        %v912 = vadd.f32 0.0, %v911
        %v913 = vpop.f32.mrb[0].mxu0
        %v914 = vadd.f32 0.0, %v913
        %915 = vdwg.mxu0
        %v916 = vadd.f32 %v825, %v912
        %v917 = vadd.f32 %v826, %v914
        %918 = vrot.lane.b32.xlu0 %v277, 95
        %v919 = vpop.permute.xlu0 %918
        %920 = vrot.lane.b32.xlu0 %v286, 95
        %v921 = vpop.permute.xlu0 %920
        %vm922 = vcmp.lt.s32.totalorder %v375, 95
        %v923 = vsel %vm922, %v919, %v921
        %v924 = vsel %vm922, %v921, %v919
        %s925 = scalar_lea.vmem %s1, 56
        %v926 = vld [vmem:[%s925] sm:$0xff]
        %v928 = vsel %vm287, %v926, 0
        %v931 = vsel %vm291, %v923, 0
        %v934 = vsel %vm291, %v924, 0
        %936 = vmatprep.subr.mxu0 %v934
        %937 = vmatpush1.msra.mxu0 %v931
        %938 = vmatprep.subr.mxu0 0.0
        %939 = vmatpush1.msra.mxu0 0.0
        %940 = vmatprep.subr.mxu0 0.0
        %941 = vmatpush1.msra.mxu0 0.0
        %942 = vmatprep.subr.mxu0 0.0
        %943 = vmatpush1.msra.mxu0 0.0
        %944 = vmatprep.subr.mxu0 0.0
        %945 = vmatpush1.msra.mxu0 0.0
        %946 = vmatprep.subr.mxu0 0.0
        %947 = vmatpush1.msra.mxu0 0.0
        %948 = vmatprep.subr.mxu0 0.0
        %949 = vmatpush1.msra.mxu0 0.0
        %950 = vmatprep.subr.mxu0 0.0
        %951 = vmatpush1.msra.mxu0 0.0
        %952 = vmatprep.subr.mxu0 0.0
        %953 = vmatpush1.msra.mxu0 0.0
        %954 = vmatprep.subr.mxu0 0.0
        %955 = vmatpush1.msra.mxu0 0.0
        %956 = vmatprep.subr.mxu0 0.0
        %957 = vmatpush1.msra.mxu0 0.0
        %958 = vmatprep.subr.mxu0 0.0
        %959 = vmatpush1.msra.mxu0 0.0
        %960 = vmatprep.subr.mxu0 0.0
        %961 = vmatpush1.msra.mxu0 0.0
        %962 = vmatprep.subr.mxu0 0.0
        %963 = vmatpush1.msra.mxu0 0.0
        %964 = vmatprep.subr.mxu0 0.0
        %965 = vmatpush1.msra.mxu0 0.0
        %966 = vmatprep.subr.mxu0 0.0
        %967 = vmatpush1.msra.mxu0 0.0
        %968 = vmatprep.subr.mxu0 0.0
        %969 = vmatpush1.msra.mxu0 0.0
        %970 = vmatprep.subr.mxu0 0.0
        %971 = vmatpush1.msra.mxu0 0.0
        %972 = vmatprep.subr.mxu0 0.0
        %973 = vmatpush1.msra.mxu0 0.0
        %974 = vmatprep.subr.mxu0 0.0
        %975 = vmatpush1.msra.mxu0 0.0
        %976 = vmatprep.subr.mxu0 0.0
        %977 = vmatpush1.msra.mxu0 0.0
        %978 = vmatprep.subr.mxu0 0.0
        %979 = vmatpush1.msra.mxu0 0.0
        %980 = vmatprep.subr.mxu0 0.0
        %981 = vmatpush1.msra.mxu0 0.0
        %982 = vmatprep.subr.mxu0 0.0
        %983 = vmatpush1.msra.mxu0 0.0
        %984 = vmatprep.subr.mxu0 0.0
        %985 = vmatpush1.msra.mxu0 0.0
        %986 = vmatprep.subr.mxu0 0.0
        %987 = vmatpush1.msra.mxu0 0.0
        %988 = vmatprep.subr.mxu0 0.0
        %989 = vmatpush1.msra.mxu0 0.0
        %990 = vmatprep.subr.mxu0 0.0
        %991 = vmatpush1.msra.mxu0 0.0
        %992 = vmatprep.subr.mxu0 0.0
        %993 = vmatpush1.msra.mxu0 0.0
        %994 = vmatprep.subr.mxu0 0.0
        %995 = vmatpush1.msra.mxu0 0.0
        %996 = vmatprep.subr.mxu0 0.0
        %997 = vmatpush1.msra.mxu0 0.0
        %998 = vmatprep.subr.mxu0 0.0
        %999 = vmatpush1.msra.mxu0 0.0
        %1000 = vmatprep.mubr.f32.mxu0 0.0
        %1001 = vmatmul.mubr.f32.gmra.mrb[0].mxu0 %v928
        %v1002 = vpop.f32.mrb[0].mxu0
        %v1003 = vadd.f32 0.0, %v1002
        %v1004 = vpop.f32.mrb[0].mxu0
        %v1005 = vadd.f32 0.0, %v1004
        %1006 = vdwg.mxu0
        %v1007 = vadd.f32 %v916, %v1003
        %v1008 = vadd.f32 %v917, %v1005
        %1009 = vrot.lane.b32.xlu0 %v277, 94
        %v1010 = vpop.permute.xlu0 %1009
        %1011 = vrot.lane.b32.xlu0 %v286, 94
        %v1012 = vpop.permute.xlu0 %1011
        %vm1013 = vcmp.lt.s32.totalorder %v375, 94
        %v1014 = vsel %vm1013, %v1010, %v1012
        %v1015 = vsel %vm1013, %v1012, %v1010
        %s1016 = scalar_lea.vmem %s1, 64
        %v1017 = vld [vmem:[%s1016] sm:$0xff]
        %v1019 = vsel %vm287, %v1017, 0
        %v1022 = vsel %vm291, %v1014, 0
        %v1025 = vsel %vm291, %v1015, 0
        %1027 = vmatprep.subr.mxu0 %v1025
        %1028 = vmatpush1.msra.mxu0 %v1022
        %1029 = vmatprep.subr.mxu0 0.0
        %1030 = vmatpush1.msra.mxu0 0.0
        %1031 = vmatprep.subr.mxu0 0.0
        %1032 = vmatpush1.msra.mxu0 0.0
        %1033 = vmatprep.subr.mxu0 0.0
        %1034 = vmatpush1.msra.mxu0 0.0
        %1035 = vmatprep.subr.mxu0 0.0
        %1036 = vmatpush1.msra.mxu0 0.0
        %1037 = vmatprep.subr.mxu0 0.0
        %1038 = vmatpush1.msra.mxu0 0.0
        %1039 = vmatprep.subr.mxu0 0.0
        %1040 = vmatpush1.msra.mxu0 0.0
        %1041 = vmatprep.subr.mxu0 0.0
        %1042 = vmatpush1.msra.mxu0 0.0
        %1043 = vmatprep.subr.mxu0 0.0
        %1044 = vmatpush1.msra.mxu0 0.0
        %1045 = vmatprep.subr.mxu0 0.0
        %1046 = vmatpush1.msra.mxu0 0.0
        %1047 = vmatprep.subr.mxu0 0.0
        %1048 = vmatpush1.msra.mxu0 0.0
        %1049 = vmatprep.subr.mxu0 0.0
        %1050 = vmatpush1.msra.mxu0 0.0
        %1051 = vmatprep.subr.mxu0 0.0
        %1052 = vmatpush1.msra.mxu0 0.0
        %1053 = vmatprep.subr.mxu0 0.0
        %1054 = vmatpush1.msra.mxu0 0.0
        %1055 = vmatprep.subr.mxu0 0.0
        %1056 = vmatpush1.msra.mxu0 0.0
        %1057 = vmatprep.subr.mxu0 0.0
        %1058 = vmatpush1.msra.mxu0 0.0
        %1059 = vmatprep.subr.mxu0 0.0
        %1060 = vmatpush1.msra.mxu0 0.0
        %1061 = vmatprep.subr.mxu0 0.0
        %1062 = vmatpush1.msra.mxu0 0.0
        %1063 = vmatprep.subr.mxu0 0.0
        %1064 = vmatpush1.msra.mxu0 0.0
        %1065 = vmatprep.subr.mxu0 0.0
        %1066 = vmatpush1.msra.mxu0 0.0
        %1067 = vmatprep.subr.mxu0 0.0
        %1068 = vmatpush1.msra.mxu0 0.0
        %1069 = vmatprep.subr.mxu0 0.0
        %1070 = vmatpush1.msra.mxu0 0.0
        %1071 = vmatprep.subr.mxu0 0.0
        %1072 = vmatpush1.msra.mxu0 0.0
        %1073 = vmatprep.subr.mxu0 0.0
        %1074 = vmatpush1.msra.mxu0 0.0
        %1075 = vmatprep.subr.mxu0 0.0
        %1076 = vmatpush1.msra.mxu0 0.0
        %1077 = vmatprep.subr.mxu0 0.0
        %1078 = vmatpush1.msra.mxu0 0.0
        %1079 = vmatprep.subr.mxu0 0.0
        %1080 = vmatpush1.msra.mxu0 0.0
        %1081 = vmatprep.subr.mxu0 0.0
        %1082 = vmatpush1.msra.mxu0 0.0
        %1083 = vmatprep.subr.mxu0 0.0
        %1084 = vmatpush1.msra.mxu0 0.0
        %1085 = vmatprep.subr.mxu0 0.0
        %1086 = vmatpush1.msra.mxu0 0.0
        %1087 = vmatprep.subr.mxu0 0.0
        %1088 = vmatpush1.msra.mxu0 0.0
        %1089 = vmatprep.subr.mxu0 0.0
        %1090 = vmatpush1.msra.mxu0 0.0
        %1091 = vmatprep.mubr.f32.mxu0 0.0
        %1092 = vmatmul.mubr.f32.gmra.mrb[0].mxu0 %v1019
        %v1093 = vpop.f32.mrb[0].mxu0
        %v1094 = vadd.f32 0.0, %v1093
        %v1095 = vpop.f32.mrb[0].mxu0
        %v1096 = vadd.f32 0.0, %v1095
        %1097 = vdwg.mxu0
        %v1098 = vadd.f32 %v1007, %v1094
        %v1099 = vadd.f32 %v1008, %v1096
        %v1100 = vmax.f32 %v1098, 0.0
        %v1101 = vmax.f32 %v1099, 0.0
        %v1102 = vld [vmem:[%s4] sm:$0xff]
        %1104 = vset.pattern.permute.xlu0 0
        %1105 = vperm.xlu0 %1104, %v1102
        %v1106 = vpop.permute.xlu0 %1105
        %v1108 = vld [vmem:[%s3] sm:$0xff]
        %vm1109 = vcmask 64512
        %v1111 = vsel %vm1109, %v1108, 0
        %1113 = vmatprep.subr.mxu0 %v1101
        %1114 = vmatpush1.msra.mxu0 %v1100
        %1115 = vmatprep.subr.mxu0 0.0
        %1116 = vmatpush1.msra.mxu0 0.0
        %1117 = vmatprep.subr.mxu0 0.0
        %1118 = vmatpush1.msra.mxu0 0.0
        %1119 = vmatprep.subr.mxu0 0.0
        %1120 = vmatpush1.msra.mxu0 0.0
        %1121 = vmatprep.subr.mxu0 0.0
        %1122 = vmatpush1.msra.mxu0 0.0
        %1123 = vmatprep.subr.mxu0 0.0
        %1124 = vmatpush1.msra.mxu0 0.0
        %1125 = vmatprep.subr.mxu0 0.0
        %1126 = vmatpush1.msra.mxu0 0.0
        %1127 = vmatprep.subr.mxu0 0.0
        %1128 = vmatpush1.msra.mxu0 0.0
        %1129 = vmatprep.subr.mxu0 0.0
        %1130 = vmatpush1.msra.mxu0 0.0
        %1131 = vmatprep.subr.mxu0 0.0
        %1132 = vmatpush1.msra.mxu0 0.0
        %1133 = vmatprep.subr.mxu0 0.0
        %1134 = vmatpush1.msra.mxu0 0.0
        %1135 = vmatprep.subr.mxu0 0.0
        %1136 = vmatpush1.msra.mxu0 0.0
        %1137 = vmatprep.subr.mxu0 0.0
        %1138 = vmatpush1.msra.mxu0 0.0
        %1139 = vmatprep.subr.mxu0 0.0
        %1140 = vmatpush1.msra.mxu0 0.0
        %1141 = vmatprep.subr.mxu0 0.0
        %1142 = vmatpush1.msra.mxu0 0.0
        %1143 = vmatprep.subr.mxu0 0.0
        %1144 = vmatpush1.msra.mxu0 0.0
        %1145 = vmatprep.subr.mxu0 0.0
        %1146 = vmatpush1.msra.mxu0 0.0
        %1147 = vmatprep.subr.mxu0 0.0
        %1148 = vmatpush1.msra.mxu0 0.0
        %1149 = vmatprep.subr.mxu0 0.0
        %1150 = vmatpush1.msra.mxu0 0.0
        %1151 = vmatprep.subr.mxu0 0.0
        %1152 = vmatpush1.msra.mxu0 0.0
        %1153 = vmatprep.subr.mxu0 0.0
        %1154 = vmatpush1.msra.mxu0 0.0
        %1155 = vmatprep.subr.mxu0 0.0
        %1156 = vmatpush1.msra.mxu0 0.0
        %1157 = vmatprep.subr.mxu0 0.0
        %1158 = vmatpush1.msra.mxu0 0.0
        %1159 = vmatprep.subr.mxu0 0.0
        %1160 = vmatpush1.msra.mxu0 0.0
        %1161 = vmatprep.subr.mxu0 0.0
        %1162 = vmatpush1.msra.mxu0 0.0
        %1163 = vmatprep.subr.mxu0 0.0
        %1164 = vmatpush1.msra.mxu0 0.0
        %1165 = vmatprep.subr.mxu0 0.0
        %1166 = vmatpush1.msra.mxu0 0.0
        %1167 = vmatprep.subr.mxu0 0.0
        %1168 = vmatpush1.msra.mxu0 0.0
        %1169 = vmatprep.subr.mxu0 0.0
        %1170 = vmatpush1.msra.mxu0 0.0
        %1171 = vmatprep.subr.mxu0 0.0
        %1172 = vmatpush1.msra.mxu0 0.0
        %1173 = vmatprep.subr.mxu0 0.0
        %1174 = vmatpush1.msra.mxu0 0.0
        %1175 = vmatprep.subr.mxu0 0.0
        %1176 = vmatpush1.msra.mxu0 0.0
        %1177 = vmatprep.mubr.f32.mxu0 0.0
        %1178 = vmatmul.mubr.f32.gmra.mrb[0].mxu0 %v1111
        %v1179 = vpop.f32.mrb[0].mxu0
        %v1180 = vadd.f32 0.0, %v1179
        %v1181 = vpop.f32.mrb[0].mxu0
        %v1182 = vadd.f32 0.0, %v1181
        %1183 = vdwg.mxu0
        %v1184 = vadd.f32 %v1106, %v1180
        %v1185 = vadd.f32 %v1106, %v1182
        %1186 = vrot.lane.b32.xlu0 %v1100, 127
        %v1187 = vpop.permute.xlu0 %1186
        %1188 = vrot.lane.b32.xlu0 %v1101, 127
        %v1189 = vpop.permute.xlu0 %1188
        %v1190 = vsel %vm376, %v1187, %v1189
        %v1191 = vsel %vm376, %v1189, %v1187
        %s1192 = scalar_lea.vmem %s3, 8
        %v1193 = vld [vmem:[%s1192] sm:$0xff]
        %v1195 = vsel %vm1109, %v1193, 0
        %1197 = vmatprep.subr.mxu0 %v1191
        %1198 = vmatpush1.msra.mxu0 %v1190
        %1199 = vmatprep.subr.mxu0 0.0
        %1200 = vmatpush1.msra.mxu0 0.0
        %1201 = vmatprep.subr.mxu0 0.0
        %1202 = vmatpush1.msra.mxu0 0.0
        %1203 = vmatprep.subr.mxu0 0.0
        %1204 = vmatpush1.msra.mxu0 0.0
        %1205 = vmatprep.subr.mxu0 0.0
        %1206 = vmatpush1.msra.mxu0 0.0
        %1207 = vmatprep.subr.mxu0 0.0
        %1208 = vmatpush1.msra.mxu0 0.0
        %1209 = vmatprep.subr.mxu0 0.0
        %1210 = vmatpush1.msra.mxu0 0.0
        %1211 = vmatprep.subr.mxu0 0.0
        %1212 = vmatpush1.msra.mxu0 0.0
        %1213 = vmatprep.subr.mxu0 0.0
        %1214 = vmatpush1.msra.mxu0 0.0
        %1215 = vmatprep.subr.mxu0 0.0
        %1216 = vmatpush1.msra.mxu0 0.0
        %1217 = vmatprep.subr.mxu0 0.0
        %1218 = vmatpush1.msra.mxu0 0.0
        %1219 = vmatprep.subr.mxu0 0.0
        %1220 = vmatpush1.msra.mxu0 0.0
        %1221 = vmatprep.subr.mxu0 0.0
        %1222 = vmatpush1.msra.mxu0 0.0
        %1223 = vmatprep.subr.mxu0 0.0
        %1224 = vmatpush1.msra.mxu0 0.0
        %1225 = vmatprep.subr.mxu0 0.0
        %1226 = vmatpush1.msra.mxu0 0.0
        %1227 = vmatprep.subr.mxu0 0.0
        %1228 = vmatpush1.msra.mxu0 0.0
        %1229 = vmatprep.subr.mxu0 0.0
        %1230 = vmatpush1.msra.mxu0 0.0
        %1231 = vmatprep.subr.mxu0 0.0
        %1232 = vmatpush1.msra.mxu0 0.0
        %1233 = vmatprep.subr.mxu0 0.0
        %1234 = vmatpush1.msra.mxu0 0.0
        %1235 = vmatprep.subr.mxu0 0.0
        %1236 = vmatpush1.msra.mxu0 0.0
        %1237 = vmatprep.subr.mxu0 0.0
        %1238 = vmatpush1.msra.mxu0 0.0
        %1239 = vmatprep.subr.mxu0 0.0
        %1240 = vmatpush1.msra.mxu0 0.0
        %1241 = vmatprep.subr.mxu0 0.0
        %1242 = vmatpush1.msra.mxu0 0.0
        %1243 = vmatprep.subr.mxu0 0.0
        %1244 = vmatpush1.msra.mxu0 0.0
        %1245 = vmatprep.subr.mxu0 0.0
        %1246 = vmatpush1.msra.mxu0 0.0
        %1247 = vmatprep.subr.mxu0 0.0
        %1248 = vmatpush1.msra.mxu0 0.0
        %1249 = vmatprep.subr.mxu0 0.0
        %1250 = vmatpush1.msra.mxu0 0.0
        %1251 = vmatprep.subr.mxu0 0.0
        %1252 = vmatpush1.msra.mxu0 0.0
        %1253 = vmatprep.subr.mxu0 0.0
        %1254 = vmatpush1.msra.mxu0 0.0
        %1255 = vmatprep.subr.mxu0 0.0
        %1256 = vmatpush1.msra.mxu0 0.0
        %1257 = vmatprep.subr.mxu0 0.0
        %1258 = vmatpush1.msra.mxu0 0.0
        %1259 = vmatprep.subr.mxu0 0.0
        %1260 = vmatpush1.msra.mxu0 0.0
        %1261 = vmatprep.mubr.f32.mxu0 0.0
        %1262 = vmatmul.mubr.f32.gmra.mrb[0].mxu0 %v1195
        %v1263 = vpop.f32.mrb[0].mxu0
        %v1264 = vadd.f32 0.0, %v1263
        %v1265 = vpop.f32.mrb[0].mxu0
        %v1266 = vadd.f32 0.0, %v1265
        %1267 = vdwg.mxu0
        %v1268 = vadd.f32 %v1184, %v1264
        %v1269 = vadd.f32 %v1185, %v1266
        %1270 = vrot.lane.b32.xlu0 %v1100, 126
        %v1271 = vpop.permute.xlu0 %1270
        %1272 = vrot.lane.b32.xlu0 %v1101, 126
        %v1273 = vpop.permute.xlu0 %1272
        %v1274 = vsel %vm467, %v1271, %v1273
        %v1275 = vsel %vm467, %v1273, %v1271
        %s1276 = scalar_lea.vmem %s3, 16
        %v1277 = vld [vmem:[%s1276] sm:$0xff]
        %v1279 = vsel %vm1109, %v1277, 0
        %1281 = vmatprep.subr.mxu0 %v1275
        %1282 = vmatpush1.msra.mxu0 %v1274
        %1283 = vmatprep.subr.mxu0 0.0
        %1284 = vmatpush1.msra.mxu0 0.0
        %1285 = vmatprep.subr.mxu0 0.0
        %1286 = vmatpush1.msra.mxu0 0.0
        %1287 = vmatprep.subr.mxu0 0.0
        %1288 = vmatpush1.msra.mxu0 0.0
        %1289 = vmatprep.subr.mxu0 0.0
        %1290 = vmatpush1.msra.mxu0 0.0
        %1291 = vmatprep.subr.mxu0 0.0
        %1292 = vmatpush1.msra.mxu0 0.0
        %1293 = vmatprep.subr.mxu0 0.0
        %1294 = vmatpush1.msra.mxu0 0.0
        %1295 = vmatprep.subr.mxu0 0.0
        %1296 = vmatpush1.msra.mxu0 0.0
        %1297 = vmatprep.subr.mxu0 0.0
        %1298 = vmatpush1.msra.mxu0 0.0
        %1299 = vmatprep.subr.mxu0 0.0
        %1300 = vmatpush1.msra.mxu0 0.0
        %1301 = vmatprep.subr.mxu0 0.0
        %1302 = vmatpush1.msra.mxu0 0.0
        %1303 = vmatprep.subr.mxu0 0.0
        %1304 = vmatpush1.msra.mxu0 0.0
        %1305 = vmatprep.subr.mxu0 0.0
        %1306 = vmatpush1.msra.mxu0 0.0
        %1307 = vmatprep.subr.mxu0 0.0
        %1308 = vmatpush1.msra.mxu0 0.0
        %1309 = vmatprep.subr.mxu0 0.0
        %1310 = vmatpush1.msra.mxu0 0.0
        %1311 = vmatprep.subr.mxu0 0.0
        %1312 = vmatpush1.msra.mxu0 0.0
        %1313 = vmatprep.subr.mxu0 0.0
        %1314 = vmatpush1.msra.mxu0 0.0
        %1315 = vmatprep.subr.mxu0 0.0
        %1316 = vmatpush1.msra.mxu0 0.0
        %1317 = vmatprep.subr.mxu0 0.0
        %1318 = vmatpush1.msra.mxu0 0.0
        %1319 = vmatprep.subr.mxu0 0.0
        %1320 = vmatpush1.msra.mxu0 0.0
        %1321 = vmatprep.subr.mxu0 0.0
        %1322 = vmatpush1.msra.mxu0 0.0
        %1323 = vmatprep.subr.mxu0 0.0
        %1324 = vmatpush1.msra.mxu0 0.0
        %1325 = vmatprep.subr.mxu0 0.0
        %1326 = vmatpush1.msra.mxu0 0.0
        %1327 = vmatprep.subr.mxu0 0.0
        %1328 = vmatpush1.msra.mxu0 0.0
        %1329 = vmatprep.subr.mxu0 0.0
        %1330 = vmatpush1.msra.mxu0 0.0
        %1331 = vmatprep.subr.mxu0 0.0
        %1332 = vmatpush1.msra.mxu0 0.0
        %1333 = vmatprep.subr.mxu0 0.0
        %1334 = vmatpush1.msra.mxu0 0.0
        %1335 = vmatprep.subr.mxu0 0.0
        %1336 = vmatpush1.msra.mxu0 0.0
        %1337 = vmatprep.subr.mxu0 0.0
        %1338 = vmatpush1.msra.mxu0 0.0
        %1339 = vmatprep.subr.mxu0 0.0
        %1340 = vmatpush1.msra.mxu0 0.0
        %1341 = vmatprep.subr.mxu0 0.0
        %1342 = vmatpush1.msra.mxu0 0.0
        %1343 = vmatprep.subr.mxu0 0.0
        %1344 = vmatpush1.msra.mxu0 0.0
        %1345 = vmatprep.mubr.f32.mxu0 0.0
        %1346 = vmatmul.mubr.f32.gmra.mrb[0].mxu0 %v1279
        %v1347 = vpop.f32.mrb[0].mxu0
        %v1348 = vadd.f32 0.0, %v1347
        %v1349 = vpop.f32.mrb[0].mxu0
        %v1350 = vadd.f32 0.0, %v1349
        %1351 = vdwg.mxu0
        %v1352 = vadd.f32 %v1268, %v1348
        %v1353 = vadd.f32 %v1269, %v1350
        %1354 = vrot.lane.b32.xlu0 %v1100, 112
        %v1355 = vpop.permute.xlu0 %1354
        %1356 = vrot.lane.b32.xlu0 %v1101, 112
        %v1357 = vpop.permute.xlu0 %1356
        %v1358 = vsel %vm558, %v1355, %v1357
        %v1359 = vsel %vm558, %v1357, %v1355
        %s1360 = scalar_lea.vmem %s3, 24
        %v1361 = vld [vmem:[%s1360] sm:$0xff]
        %v1363 = vsel %vm1109, %v1361, 0
        %1365 = vmatprep.subr.mxu0 %v1359
        %1366 = vmatpush1.msra.mxu0 %v1358
        %1367 = vmatprep.subr.mxu0 0.0
        %1368 = vmatpush1.msra.mxu0 0.0
        %1369 = vmatprep.subr.mxu0 0.0
        %1370 = vmatpush1.msra.mxu0 0.0
        %1371 = vmatprep.subr.mxu0 0.0
        %1372 = vmatpush1.msra.mxu0 0.0
        %1373 = vmatprep.subr.mxu0 0.0
        %1374 = vmatpush1.msra.mxu0 0.0
        %1375 = vmatprep.subr.mxu0 0.0
        %1376 = vmatpush1.msra.mxu0 0.0
        %1377 = vmatprep.subr.mxu0 0.0
        %1378 = vmatpush1.msra.mxu0 0.0
        %1379 = vmatprep.subr.mxu0 0.0
        %1380 = vmatpush1.msra.mxu0 0.0
        %1381 = vmatprep.subr.mxu0 0.0
        %1382 = vmatpush1.msra.mxu0 0.0
        %1383 = vmatprep.subr.mxu0 0.0
        %1384 = vmatpush1.msra.mxu0 0.0
        %1385 = vmatprep.subr.mxu0 0.0
        %1386 = vmatpush1.msra.mxu0 0.0
        %1387 = vmatprep.subr.mxu0 0.0
        %1388 = vmatpush1.msra.mxu0 0.0
        %1389 = vmatprep.subr.mxu0 0.0
        %1390 = vmatpush1.msra.mxu0 0.0
        %1391 = vmatprep.subr.mxu0 0.0
        %1392 = vmatpush1.msra.mxu0 0.0
        %1393 = vmatprep.subr.mxu0 0.0
        %1394 = vmatpush1.msra.mxu0 0.0
        %1395 = vmatprep.subr.mxu0 0.0
        %1396 = vmatpush1.msra.mxu0 0.0
        %1397 = vmatprep.subr.mxu0 0.0
        %1398 = vmatpush1.msra.mxu0 0.0
        %1399 = vmatprep.subr.mxu0 0.0
        %1400 = vmatpush1.msra.mxu0 0.0
        %1401 = vmatprep.subr.mxu0 0.0
        %1402 = vmatpush1.msra.mxu0 0.0
        %1403 = vmatprep.subr.mxu0 0.0
        %1404 = vmatpush1.msra.mxu0 0.0
        %1405 = vmatprep.subr.mxu0 0.0
        %1406 = vmatpush1.msra.mxu0 0.0
        %1407 = vmatprep.subr.mxu0 0.0
        %1408 = vmatpush1.msra.mxu0 0.0
        %1409 = vmatprep.subr.mxu0 0.0
        %1410 = vmatpush1.msra.mxu0 0.0
        %1411 = vmatprep.subr.mxu0 0.0
        %1412 = vmatpush1.msra.mxu0 0.0
        %1413 = vmatprep.subr.mxu0 0.0
        %1414 = vmatpush1.msra.mxu0 0.0
        %1415 = vmatprep.subr.mxu0 0.0
        %1416 = vmatpush1.msra.mxu0 0.0
        %1417 = vmatprep.subr.mxu0 0.0
        %1418 = vmatpush1.msra.mxu0 0.0
        %1419 = vmatprep.subr.mxu0 0.0
        %1420 = vmatpush1.msra.mxu0 0.0
        %1421 = vmatprep.subr.mxu0 0.0
        %1422 = vmatpush1.msra.mxu0 0.0
        %1423 = vmatprep.subr.mxu0 0.0
        %1424 = vmatpush1.msra.mxu0 0.0
        %1425 = vmatprep.subr.mxu0 0.0
        %1426 = vmatpush1.msra.mxu0 0.0
        %1427 = vmatprep.subr.mxu0 0.0
        %1428 = vmatpush1.msra.mxu0 0.0
        %1429 = vmatprep.mubr.f32.mxu0 0.0
        %1430 = vmatmul.mubr.f32.gmra.mrb[0].mxu0 %v1363
        %v1431 = vpop.f32.mrb[0].mxu0
        %v1432 = vadd.f32 0.0, %v1431
        %v1433 = vpop.f32.mrb[0].mxu0
        %v1434 = vadd.f32 0.0, %v1433
        %1435 = vdwg.mxu0
        %v1436 = vadd.f32 %v1352, %v1432
        %v1437 = vadd.f32 %v1353, %v1434
        %1438 = vrot.lane.b32.xlu0 %v1100, 111
        %v1439 = vpop.permute.xlu0 %1438
        %1440 = vrot.lane.b32.xlu0 %v1101, 111
        %v1441 = vpop.permute.xlu0 %1440
        %v1442 = vsel %vm649, %v1439, %v1441
        %v1443 = vsel %vm649, %v1441, %v1439
        %s1444 = scalar_lea.vmem %s3, 32
        %v1445 = vld [vmem:[%s1444] sm:$0xff]
        %v1447 = vsel %vm1109, %v1445, 0
        %1449 = vmatprep.subr.mxu0 %v1443
        %1450 = vmatpush1.msra.mxu0 %v1442
        %1451 = vmatprep.subr.mxu0 0.0
        %1452 = vmatpush1.msra.mxu0 0.0
        %1453 = vmatprep.subr.mxu0 0.0
        %1454 = vmatpush1.msra.mxu0 0.0
        %1455 = vmatprep.subr.mxu0 0.0
        %1456 = vmatpush1.msra.mxu0 0.0
        %1457 = vmatprep.subr.mxu0 0.0
        %1458 = vmatpush1.msra.mxu0 0.0
        %1459 = vmatprep.subr.mxu0 0.0
        %1460 = vmatpush1.msra.mxu0 0.0
        %1461 = vmatprep.subr.mxu0 0.0
        %1462 = vmatpush1.msra.mxu0 0.0
        %1463 = vmatprep.subr.mxu0 0.0
        %1464 = vmatpush1.msra.mxu0 0.0
        %1465 = vmatprep.subr.mxu0 0.0
        %1466 = vmatpush1.msra.mxu0 0.0
        %1467 = vmatprep.subr.mxu0 0.0
        %1468 = vmatpush1.msra.mxu0 0.0
        %1469 = vmatprep.subr.mxu0 0.0
        %1470 = vmatpush1.msra.mxu0 0.0
        %1471 = vmatprep.subr.mxu0 0.0
        %1472 = vmatpush1.msra.mxu0 0.0
        %1473 = vmatprep.subr.mxu0 0.0
        %1474 = vmatpush1.msra.mxu0 0.0
        %1475 = vmatprep.subr.mxu0 0.0
        %1476 = vmatpush1.msra.mxu0 0.0
        %1477 = vmatprep.subr.mxu0 0.0
        %1478 = vmatpush1.msra.mxu0 0.0
        %1479 = vmatprep.subr.mxu0 0.0
        %1480 = vmatpush1.msra.mxu0 0.0
        %1481 = vmatprep.subr.mxu0 0.0
        %1482 = vmatpush1.msra.mxu0 0.0
        %1483 = vmatprep.subr.mxu0 0.0
        %1484 = vmatpush1.msra.mxu0 0.0
        %1485 = vmatprep.subr.mxu0 0.0
        %1486 = vmatpush1.msra.mxu0 0.0
        %1487 = vmatprep.subr.mxu0 0.0
        %1488 = vmatpush1.msra.mxu0 0.0
        %1489 = vmatprep.subr.mxu0 0.0
        %1490 = vmatpush1.msra.mxu0 0.0
        %1491 = vmatprep.subr.mxu0 0.0
        %1492 = vmatpush1.msra.mxu0 0.0
        %1493 = vmatprep.subr.mxu0 0.0
        %1494 = vmatpush1.msra.mxu0 0.0
        %1495 = vmatprep.subr.mxu0 0.0
        %1496 = vmatpush1.msra.mxu0 0.0
        %1497 = vmatprep.subr.mxu0 0.0
        %1498 = vmatpush1.msra.mxu0 0.0
        %1499 = vmatprep.subr.mxu0 0.0
        %1500 = vmatpush1.msra.mxu0 0.0
        %1501 = vmatprep.subr.mxu0 0.0
        %1502 = vmatpush1.msra.mxu0 0.0
        %1503 = vmatprep.subr.mxu0 0.0
        %1504 = vmatpush1.msra.mxu0 0.0
        %1505 = vmatprep.subr.mxu0 0.0
        %1506 = vmatpush1.msra.mxu0 0.0
        %1507 = vmatprep.subr.mxu0 0.0
        %1508 = vmatpush1.msra.mxu0 0.0
        %1509 = vmatprep.subr.mxu0 0.0
        %1510 = vmatpush1.msra.mxu0 0.0
        %1511 = vmatprep.subr.mxu0 0.0
        %1512 = vmatpush1.msra.mxu0 0.0
        %1513 = vmatprep.mubr.f32.mxu0 0.0
        %1514 = vmatmul.mubr.f32.gmra.mrb[0].mxu0 %v1447
        %v1515 = vpop.f32.mrb[0].mxu0
        %v1516 = vadd.f32 0.0, %v1515
        %v1517 = vpop.f32.mrb[0].mxu0
        %v1518 = vadd.f32 0.0, %v1517
        %1519 = vdwg.mxu0
        %v1520 = vadd.f32 %v1436, %v1516
        %v1521 = vadd.f32 %v1437, %v1518
        %1522 = vrot.lane.b32.xlu0 %v1100, 110
        %v1523 = vpop.permute.xlu0 %1522
        %1524 = vrot.lane.b32.xlu0 %v1101, 110
        %v1525 = vpop.permute.xlu0 %1524
        %v1526 = vsel %vm740, %v1523, %v1525
        %v1527 = vsel %vm740, %v1525, %v1523
        %s1528 = scalar_lea.vmem %s3, 40
        %v1529 = vld [vmem:[%s1528] sm:$0xff]
        %v1531 = vsel %vm1109, %v1529, 0
        %1533 = vmatprep.subr.mxu0 %v1527
        %1534 = vmatpush1.msra.mxu0 %v1526
        %1535 = vmatprep.subr.mxu0 0.0
        %1536 = vmatpush1.msra.mxu0 0.0
        %1537 = vmatprep.subr.mxu0 0.0
        %1538 = vmatpush1.msra.mxu0 0.0
        %1539 = vmatprep.subr.mxu0 0.0
        %1540 = vmatpush1.msra.mxu0 0.0
        %1541 = vmatprep.subr.mxu0 0.0
        %1542 = vmatpush1.msra.mxu0 0.0
        %1543 = vmatprep.subr.mxu0 0.0
        %1544 = vmatpush1.msra.mxu0 0.0
        %1545 = vmatprep.subr.mxu0 0.0
        %1546 = vmatpush1.msra.mxu0 0.0
        %1547 = vmatprep.subr.mxu0 0.0
        %1548 = vmatpush1.msra.mxu0 0.0
        %1549 = vmatprep.subr.mxu0 0.0
        %1550 = vmatpush1.msra.mxu0 0.0
        %1551 = vmatprep.subr.mxu0 0.0
        %1552 = vmatpush1.msra.mxu0 0.0
        %1553 = vmatprep.subr.mxu0 0.0
        %1554 = vmatpush1.msra.mxu0 0.0
        %1555 = vmatprep.subr.mxu0 0.0
        %1556 = vmatpush1.msra.mxu0 0.0
        %1557 = vmatprep.subr.mxu0 0.0
        %1558 = vmatpush1.msra.mxu0 0.0
        %1559 = vmatprep.subr.mxu0 0.0
        %1560 = vmatpush1.msra.mxu0 0.0
        %1561 = vmatprep.subr.mxu0 0.0
        %1562 = vmatpush1.msra.mxu0 0.0
        %1563 = vmatprep.subr.mxu0 0.0
        %1564 = vmatpush1.msra.mxu0 0.0
        %1565 = vmatprep.subr.mxu0 0.0
        %1566 = vmatpush1.msra.mxu0 0.0
        %1567 = vmatprep.subr.mxu0 0.0
        %1568 = vmatpush1.msra.mxu0 0.0
        %1569 = vmatprep.subr.mxu0 0.0
        %1570 = vmatpush1.msra.mxu0 0.0
        %1571 = vmatprep.subr.mxu0 0.0
        %1572 = vmatpush1.msra.mxu0 0.0
        %1573 = vmatprep.subr.mxu0 0.0
        %1574 = vmatpush1.msra.mxu0 0.0
        %1575 = vmatprep.subr.mxu0 0.0
        %1576 = vmatpush1.msra.mxu0 0.0
        %1577 = vmatprep.subr.mxu0 0.0
        %1578 = vmatpush1.msra.mxu0 0.0
        %1579 = vmatprep.subr.mxu0 0.0
        %1580 = vmatpush1.msra.mxu0 0.0
        %1581 = vmatprep.subr.mxu0 0.0
        %1582 = vmatpush1.msra.mxu0 0.0
        %1583 = vmatprep.subr.mxu0 0.0
        %1584 = vmatpush1.msra.mxu0 0.0
        %1585 = vmatprep.subr.mxu0 0.0
        %1586 = vmatpush1.msra.mxu0 0.0
        %1587 = vmatprep.subr.mxu0 0.0
        %1588 = vmatpush1.msra.mxu0 0.0
        %1589 = vmatprep.subr.mxu0 0.0
        %1590 = vmatpush1.msra.mxu0 0.0
        %1591 = vmatprep.subr.mxu0 0.0
        %1592 = vmatpush1.msra.mxu0 0.0
        %1593 = vmatprep.subr.mxu0 0.0
        %1594 = vmatpush1.msra.mxu0 0.0
        %1595 = vmatprep.subr.mxu0 0.0
        %1596 = vmatpush1.msra.mxu0 0.0
        %1597 = vmatprep.mubr.f32.mxu0 0.0
        %1598 = vmatmul.mubr.f32.gmra.mrb[0].mxu0 %v1531
        %v1599 = vpop.f32.mrb[0].mxu0
        %v1600 = vadd.f32 0.0, %v1599
        %v1601 = vpop.f32.mrb[0].mxu0
        %v1602 = vadd.f32 0.0, %v1601
        %1603 = vdwg.mxu0
        %v1604 = vadd.f32 %v1520, %v1600
        %v1605 = vadd.f32 %v1521, %v1602
        %1606 = vrot.lane.b32.xlu0 %v1100, 96
        %v1607 = vpop.permute.xlu0 %1606
        %1608 = vrot.lane.b32.xlu0 %v1101, 96
        %v1609 = vpop.permute.xlu0 %1608
        %v1610 = vsel %vm831, %v1607, %v1609
        %v1611 = vsel %vm831, %v1609, %v1607
        %s1612 = scalar_lea.vmem %s3, 48
        %v1613 = vld [vmem:[%s1612] sm:$0xff]
        %v1615 = vsel %vm1109, %v1613, 0
        %1617 = vmatprep.subr.mxu0 %v1611
        %1618 = vmatpush1.msra.mxu0 %v1610
        %1619 = vmatprep.subr.mxu0 0.0
        %1620 = vmatpush1.msra.mxu0 0.0
        %1621 = vmatprep.subr.mxu0 0.0
        %1622 = vmatpush1.msra.mxu0 0.0
        %1623 = vmatprep.subr.mxu0 0.0
        %1624 = vmatpush1.msra.mxu0 0.0
        %1625 = vmatprep.subr.mxu0 0.0
        %1626 = vmatpush1.msra.mxu0 0.0
        %1627 = vmatprep.subr.mxu0 0.0
        %1628 = vmatpush1.msra.mxu0 0.0
        %1629 = vmatprep.subr.mxu0 0.0
        %1630 = vmatpush1.msra.mxu0 0.0
        %1631 = vmatprep.subr.mxu0 0.0
        %1632 = vmatpush1.msra.mxu0 0.0
        %1633 = vmatprep.subr.mxu0 0.0
        %1634 = vmatpush1.msra.mxu0 0.0
        %1635 = vmatprep.subr.mxu0 0.0
        %1636 = vmatpush1.msra.mxu0 0.0
        %1637 = vmatprep.subr.mxu0 0.0
        %1638 = vmatpush1.msra.mxu0 0.0
        %1639 = vmatprep.subr.mxu0 0.0
        %1640 = vmatpush1.msra.mxu0 0.0
        %1641 = vmatprep.subr.mxu0 0.0
        %1642 = vmatpush1.msra.mxu0 0.0
        %1643 = vmatprep.subr.mxu0 0.0
        %1644 = vmatpush1.msra.mxu0 0.0
        %1645 = vmatprep.subr.mxu0 0.0
        %1646 = vmatpush1.msra.mxu0 0.0
        %1647 = vmatprep.subr.mxu0 0.0
        %1648 = vmatpush1.msra.mxu0 0.0
        %1649 = vmatprep.subr.mxu0 0.0
        %1650 = vmatpush1.msra.mxu0 0.0
        %1651 = vmatprep.subr.mxu0 0.0
        %1652 = vmatpush1.msra.mxu0 0.0
        %1653 = vmatprep.subr.mxu0 0.0
        %1654 = vmatpush1.msra.mxu0 0.0
        %1655 = vmatprep.subr.mxu0 0.0
        %1656 = vmatpush1.msra.mxu0 0.0
        %1657 = vmatprep.subr.mxu0 0.0
        %1658 = vmatpush1.msra.mxu0 0.0
        %1659 = vmatprep.subr.mxu0 0.0
        %1660 = vmatpush1.msra.mxu0 0.0
        %1661 = vmatprep.subr.mxu0 0.0
        %1662 = vmatpush1.msra.mxu0 0.0
        %1663 = vmatprep.subr.mxu0 0.0
        %1664 = vmatpush1.msra.mxu0 0.0
        %1665 = vmatprep.subr.mxu0 0.0
        %1666 = vmatpush1.msra.mxu0 0.0
        %1667 = vmatprep.subr.mxu0 0.0
        %1668 = vmatpush1.msra.mxu0 0.0
        %1669 = vmatprep.subr.mxu0 0.0
        %1670 = vmatpush1.msra.mxu0 0.0
        %1671 = vmatprep.subr.mxu0 0.0
        %1672 = vmatpush1.msra.mxu0 0.0
        %1673 = vmatprep.subr.mxu0 0.0
        %1674 = vmatpush1.msra.mxu0 0.0
        %1675 = vmatprep.subr.mxu0 0.0
        %1676 = vmatpush1.msra.mxu0 0.0
        %1677 = vmatprep.subr.mxu0 0.0
        %1678 = vmatpush1.msra.mxu0 0.0
        %1679 = vmatprep.subr.mxu0 0.0
        %1680 = vmatpush1.msra.mxu0 0.0
        %1681 = vmatprep.mubr.f32.mxu0 0.0
        %1682 = vmatmul.mubr.f32.gmra.mrb[0].mxu0 %v1615
        %v1683 = vpop.f32.mrb[0].mxu0
        %v1684 = vadd.f32 0.0, %v1683
        %v1685 = vpop.f32.mrb[0].mxu0
        %v1686 = vadd.f32 0.0, %v1685
        %1687 = vdwg.mxu0
        %v1688 = vadd.f32 %v1604, %v1684
        %v1689 = vadd.f32 %v1605, %v1686
        %1690 = vrot.lane.b32.xlu0 %v1100, 95
        %v1691 = vpop.permute.xlu0 %1690
        %1692 = vrot.lane.b32.xlu0 %v1101, 95
        %v1693 = vpop.permute.xlu0 %1692
        %v1694 = vsel %vm922, %v1691, %v1693
        %v1695 = vsel %vm922, %v1693, %v1691
        %s1696 = scalar_lea.vmem %s3, 56
        %v1697 = vld [vmem:[%s1696] sm:$0xff]
        %v1699 = vsel %vm1109, %v1697, 0
        %1701 = vmatprep.subr.mxu0 %v1695
        %1702 = vmatpush1.msra.mxu0 %v1694
        %1703 = vmatprep.subr.mxu0 0.0
        %1704 = vmatpush1.msra.mxu0 0.0
        %1705 = vmatprep.subr.mxu0 0.0
        %1706 = vmatpush1.msra.mxu0 0.0
        %1707 = vmatprep.subr.mxu0 0.0
        %1708 = vmatpush1.msra.mxu0 0.0
        %1709 = vmatprep.subr.mxu0 0.0
        %1710 = vmatpush1.msra.mxu0 0.0
        %1711 = vmatprep.subr.mxu0 0.0
        %1712 = vmatpush1.msra.mxu0 0.0
        %1713 = vmatprep.subr.mxu0 0.0
        %1714 = vmatpush1.msra.mxu0 0.0
        %1715 = vmatprep.subr.mxu0 0.0
        %1716 = vmatpush1.msra.mxu0 0.0
        %1717 = vmatprep.subr.mxu0 0.0
        %1718 = vmatpush1.msra.mxu0 0.0
        %1719 = vmatprep.subr.mxu0 0.0
        %1720 = vmatpush1.msra.mxu0 0.0
        %1721 = vmatprep.subr.mxu0 0.0
        %1722 = vmatpush1.msra.mxu0 0.0
        %1723 = vmatprep.subr.mxu0 0.0
        %1724 = vmatpush1.msra.mxu0 0.0
        %1725 = vmatprep.subr.mxu0 0.0
        %1726 = vmatpush1.msra.mxu0 0.0
        %1727 = vmatprep.subr.mxu0 0.0
        %1728 = vmatpush1.msra.mxu0 0.0
        %1729 = vmatprep.subr.mxu0 0.0
        %1730 = vmatpush1.msra.mxu0 0.0
        %1731 = vmatprep.subr.mxu0 0.0
        %1732 = vmatpush1.msra.mxu0 0.0
        %1733 = vmatprep.subr.mxu0 0.0
        %1734 = vmatpush1.msra.mxu0 0.0
        %1735 = vmatprep.subr.mxu0 0.0
        %1736 = vmatpush1.msra.mxu0 0.0
        %1737 = vmatprep.subr.mxu0 0.0
        %1738 = vmatpush1.msra.mxu0 0.0
        %1739 = vmatprep.subr.mxu0 0.0
        %1740 = vmatpush1.msra.mxu0 0.0
        %1741 = vmatprep.subr.mxu0 0.0
        %1742 = vmatpush1.msra.mxu0 0.0
        %1743 = vmatprep.subr.mxu0 0.0
        %1744 = vmatpush1.msra.mxu0 0.0
        %1745 = vmatprep.subr.mxu0 0.0
        %1746 = vmatpush1.msra.mxu0 0.0
        %1747 = vmatprep.subr.mxu0 0.0
        %1748 = vmatpush1.msra.mxu0 0.0
        %1749 = vmatprep.subr.mxu0 0.0
        %1750 = vmatpush1.msra.mxu0 0.0
        %1751 = vmatprep.subr.mxu0 0.0
        %1752 = vmatpush1.msra.mxu0 0.0
        %1753 = vmatprep.subr.mxu0 0.0
        %1754 = vmatpush1.msra.mxu0 0.0
        %1755 = vmatprep.subr.mxu0 0.0
        %1756 = vmatpush1.msra.mxu0 0.0
        %1757 = vmatprep.subr.mxu0 0.0
        %1758 = vmatpush1.msra.mxu0 0.0
        %1759 = vmatprep.subr.mxu0 0.0
        %1760 = vmatpush1.msra.mxu0 0.0
        %1761 = vmatprep.subr.mxu0 0.0
        %1762 = vmatpush1.msra.mxu0 0.0
        %1763 = vmatprep.subr.mxu0 0.0
        %1764 = vmatpush1.msra.mxu0 0.0
        %1765 = vmatprep.mubr.f32.mxu0 0.0
        %1766 = vmatmul.mubr.f32.gmra.mrb[0].mxu0 %v1699
        %v1767 = vpop.f32.mrb[0].mxu0
        %v1768 = vadd.f32 0.0, %v1767
        %v1769 = vpop.f32.mrb[0].mxu0
        %v1770 = vadd.f32 0.0, %v1769
        %1771 = vdwg.mxu0
        %v1772 = vadd.f32 %v1688, %v1768
        %v1773 = vadd.f32 %v1689, %v1770
        %1774 = vrot.lane.b32.xlu0 %v1100, 94
        %v1775 = vpop.permute.xlu0 %1774
        %1776 = vrot.lane.b32.xlu0 %v1101, 94
        %v1777 = vpop.permute.xlu0 %1776
        %v1778 = vsel %vm1013, %v1775, %v1777
        %v1779 = vsel %vm1013, %v1777, %v1775
        %s1780 = scalar_lea.vmem %s3, 64
        %v1781 = vld [vmem:[%s1780] sm:$0xff]
        %v1783 = vsel %vm1109, %v1781, 0
        %1785 = vmatprep.subr.mxu0 %v1779
        %1786 = vmatpush1.msra.mxu0 %v1778
        %1787 = vmatprep.subr.mxu0 0.0
        %1788 = vmatpush1.msra.mxu0 0.0
        %1789 = vmatprep.subr.mxu0 0.0
        %1790 = vmatpush1.msra.mxu0 0.0
        %1791 = vmatprep.subr.mxu0 0.0
        %1792 = vmatpush1.msra.mxu0 0.0
        %1793 = vmatprep.subr.mxu0 0.0
        %1794 = vmatpush1.msra.mxu0 0.0
        %1795 = vmatprep.subr.mxu0 0.0
        %1796 = vmatpush1.msra.mxu0 0.0
        %1797 = vmatprep.subr.mxu0 0.0
        %1798 = vmatpush1.msra.mxu0 0.0
        %1799 = vmatprep.subr.mxu0 0.0
        %1800 = vmatpush1.msra.mxu0 0.0
        %1801 = vmatprep.subr.mxu0 0.0
        %1802 = vmatpush1.msra.mxu0 0.0
        %1803 = vmatprep.subr.mxu0 0.0
        %1804 = vmatpush1.msra.mxu0 0.0
        %1805 = vmatprep.subr.mxu0 0.0
        %1806 = vmatpush1.msra.mxu0 0.0
        %1807 = vmatprep.subr.mxu0 0.0
        %1808 = vmatpush1.msra.mxu0 0.0
        %1809 = vmatprep.subr.mxu0 0.0
        %1810 = vmatpush1.msra.mxu0 0.0
        %1811 = vmatprep.subr.mxu0 0.0
        %1812 = vmatpush1.msra.mxu0 0.0
        %1813 = vmatprep.subr.mxu0 0.0
        %1814 = vmatpush1.msra.mxu0 0.0
        %1815 = vmatprep.subr.mxu0 0.0
        %1816 = vmatpush1.msra.mxu0 0.0
        %1817 = vmatprep.subr.mxu0 0.0
        %1818 = vmatpush1.msra.mxu0 0.0
        %1819 = vmatprep.subr.mxu0 0.0
        %1820 = vmatpush1.msra.mxu0 0.0
        %1821 = vmatprep.subr.mxu0 0.0
        %1822 = vmatpush1.msra.mxu0 0.0
        %1823 = vmatprep.subr.mxu0 0.0
        %1824 = vmatpush1.msra.mxu0 0.0
        %1825 = vmatprep.subr.mxu0 0.0
        %1826 = vmatpush1.msra.mxu0 0.0
        %1827 = vmatprep.subr.mxu0 0.0
        %1828 = vmatpush1.msra.mxu0 0.0
        %1829 = vmatprep.subr.mxu0 0.0
        %1830 = vmatpush1.msra.mxu0 0.0
        %1831 = vmatprep.subr.mxu0 0.0
        %1832 = vmatpush1.msra.mxu0 0.0
        %1833 = vmatprep.subr.mxu0 0.0
        %1834 = vmatpush1.msra.mxu0 0.0
        %1835 = vmatprep.subr.mxu0 0.0
        %1836 = vmatpush1.msra.mxu0 0.0
        %1837 = vmatprep.subr.mxu0 0.0
        %1838 = vmatpush1.msra.mxu0 0.0
        %1839 = vmatprep.subr.mxu0 0.0
        %1840 = vmatpush1.msra.mxu0 0.0
        %1841 = vmatprep.subr.mxu0 0.0
        %1842 = vmatpush1.msra.mxu0 0.0
        %1843 = vmatprep.subr.mxu0 0.0
        %1844 = vmatpush1.msra.mxu0 0.0
        %1845 = vmatprep.subr.mxu0 0.0
        %1846 = vmatpush1.msra.mxu0 0.0
        %1847 = vmatprep.subr.mxu0 0.0
        %1848 = vmatpush1.msra.mxu0 0.0
        %1849 = vmatprep.mubr.f32.mxu0 0.0
        %1850 = vmatmul.mubr.f32.gmra.mrb[0].mxu0 %v1783
        %v1851 = vpop.f32.mrb[0].mxu0
        %v1852 = vadd.f32 0.0, %v1851
        %v1853 = vpop.f32.mrb[0].mxu0
        %v1854 = vadd.f32 0.0, %v1853
        %1855 = vdwg.mxu0
        %v1856 = vadd.f32 %v1772, %v1852
        %v1857 = vadd.f32 %v1773, %v1854
        %v1858 = vmax.f32 %v1856, 0.0
        %v1859 = vmax.f32 %v1857, 0.0
        %v1860 = vld [vmem:[%s6] sm:$0x3f]
        %1862 = vset.pattern.permute.xlu0 0
        %1863 = vperm.xlu0 %1862, %v1860
        %v1864 = vpop.permute.xlu0 %1863
        %v1866 = vld [vmem:[%s5] sm:$0x3f]
        %v1868 = vsel %vm1109, %v1866, 0
        %1870 = vmatprep.subr.mxu0 %v1859
        %1871 = vmatpush1.msra.mxu0 %v1858
        %1872 = vmatprep.subr.mxu0 0.0
        %1873 = vmatpush1.msra.mxu0 0.0
        %1874 = vmatprep.subr.mxu0 0.0
        %1875 = vmatpush1.msra.mxu0 0.0
        %1876 = vmatprep.subr.mxu0 0.0
        %1877 = vmatpush1.msra.mxu0 0.0
        %1878 = vmatprep.subr.mxu0 0.0
        %1879 = vmatpush1.msra.mxu0 0.0
        %1880 = vmatprep.subr.mxu0 0.0
        %1881 = vmatpush1.msra.mxu0 0.0
        %1882 = vmatprep.subr.mxu0 0.0
        %1883 = vmatpush1.msra.mxu0 0.0
        %1884 = vmatprep.subr.mxu0 0.0
        %1885 = vmatpush1.msra.mxu0 0.0
        %1886 = vmatprep.subr.mxu0 0.0
        %1887 = vmatpush1.msra.mxu0 0.0
        %1888 = vmatprep.subr.mxu0 0.0
        %1889 = vmatpush1.msra.mxu0 0.0
        %1890 = vmatprep.subr.mxu0 0.0
        %1891 = vmatpush1.msra.mxu0 0.0
        %1892 = vmatprep.subr.mxu0 0.0
        %1893 = vmatpush1.msra.mxu0 0.0
        %1894 = vmatprep.subr.mxu0 0.0
        %1895 = vmatpush1.msra.mxu0 0.0
        %1896 = vmatprep.subr.mxu0 0.0
        %1897 = vmatpush1.msra.mxu0 0.0
        %1898 = vmatprep.subr.mxu0 0.0
        %1899 = vmatpush1.msra.mxu0 0.0
        %1900 = vmatprep.subr.mxu0 0.0
        %1901 = vmatpush1.msra.mxu0 0.0
        %1902 = vmatprep.subr.mxu0 0.0
        %1903 = vmatpush1.msra.mxu0 0.0
        %1904 = vmatprep.subr.mxu0 0.0
        %1905 = vmatpush1.msra.mxu0 0.0
        %1906 = vmatprep.subr.mxu0 0.0
        %1907 = vmatpush1.msra.mxu0 0.0
        %1908 = vmatprep.subr.mxu0 0.0
        %1909 = vmatpush1.msra.mxu0 0.0
        %1910 = vmatprep.subr.mxu0 0.0
        %1911 = vmatpush1.msra.mxu0 0.0
        %1912 = vmatprep.subr.mxu0 0.0
        %1913 = vmatpush1.msra.mxu0 0.0
        %1914 = vmatprep.subr.mxu0 0.0
        %1915 = vmatpush1.msra.mxu0 0.0
        %1916 = vmatprep.subr.mxu0 0.0
        %1917 = vmatpush1.msra.mxu0 0.0
        %1918 = vmatprep.subr.mxu0 0.0
        %1919 = vmatpush1.msra.mxu0 0.0
        %1920 = vmatprep.subr.mxu0 0.0
        %1921 = vmatpush1.msra.mxu0 0.0
        %1922 = vmatprep.subr.mxu0 0.0
        %1923 = vmatpush1.msra.mxu0 0.0
        %1924 = vmatprep.subr.mxu0 0.0
        %1925 = vmatpush1.msra.mxu0 0.0
        %1926 = vmatprep.subr.mxu0 0.0
        %1927 = vmatpush1.msra.mxu0 0.0
        %1928 = vmatprep.subr.mxu0 0.0
        %1929 = vmatpush1.msra.mxu0 0.0
        %1930 = vmatprep.subr.mxu0 0.0
        %1931 = vmatpush1.msra.mxu0 0.0
        %1932 = vmatprep.subr.mxu0 0.0
        %1933 = vmatpush1.msra.mxu0 0.0
        %1934 = vmatprep.mubr.f32.mxu0 0.0
        %1935 = vmatmul.mubr.f32.gmra.mrb[0].mxu0 %v1868
        %v1936 = vpop.f32.mrb[0].mxu0
        %v1937 = vadd.f32 0.0, %v1936
        %v1938 = vpop.f32.mrb[0].mxu0
        %v1939 = vadd.f32 0.0, %v1938
        %1940 = vdwg.mxu0
        %v1941 = vadd.f32 %v1864, %v1937
        %v1942 = vadd.f32 %v1864, %v1939
        %1943 = vrot.lane.b32.xlu0 %v1858, 127
        %v1944 = vpop.permute.xlu0 %1943
        %1945 = vrot.lane.b32.xlu0 %v1859, 127
        %v1946 = vpop.permute.xlu0 %1945
        %v1947 = vsel %vm376, %v1944, %v1946
        %v1948 = vsel %vm376, %v1946, %v1944
        %s1949 = scalar_lea.vmem %s5, 8
        %v1950 = vld [vmem:[%s1949] sm:$0x3f]
        %v1952 = vsel %vm1109, %v1950, 0
        %1954 = vmatprep.subr.mxu0 %v1948
        %1955 = vmatpush1.msra.mxu0 %v1947
        %1956 = vmatprep.subr.mxu0 0.0
        %1957 = vmatpush1.msra.mxu0 0.0
        %1958 = vmatprep.subr.mxu0 0.0
        %1959 = vmatpush1.msra.mxu0 0.0
        %1960 = vmatprep.subr.mxu0 0.0
        %1961 = vmatpush1.msra.mxu0 0.0
        %1962 = vmatprep.subr.mxu0 0.0
        %1963 = vmatpush1.msra.mxu0 0.0
        %1964 = vmatprep.subr.mxu0 0.0
        %1965 = vmatpush1.msra.mxu0 0.0
        %1966 = vmatprep.subr.mxu0 0.0
        %1967 = vmatpush1.msra.mxu0 0.0
        %1968 = vmatprep.subr.mxu0 0.0
        %1969 = vmatpush1.msra.mxu0 0.0
        %1970 = vmatprep.subr.mxu0 0.0
        %1971 = vmatpush1.msra.mxu0 0.0
        %1972 = vmatprep.subr.mxu0 0.0
        %1973 = vmatpush1.msra.mxu0 0.0
        %1974 = vmatprep.subr.mxu0 0.0
        %1975 = vmatpush1.msra.mxu0 0.0
        %1976 = vmatprep.subr.mxu0 0.0
        %1977 = vmatpush1.msra.mxu0 0.0
        %1978 = vmatprep.subr.mxu0 0.0
        %1979 = vmatpush1.msra.mxu0 0.0
        %1980 = vmatprep.subr.mxu0 0.0
        %1981 = vmatpush1.msra.mxu0 0.0
        %1982 = vmatprep.subr.mxu0 0.0
        %1983 = vmatpush1.msra.mxu0 0.0
        %1984 = vmatprep.subr.mxu0 0.0
        %1985 = vmatpush1.msra.mxu0 0.0
        %1986 = vmatprep.subr.mxu0 0.0
        %1987 = vmatpush1.msra.mxu0 0.0
        %1988 = vmatprep.subr.mxu0 0.0
        %1989 = vmatpush1.msra.mxu0 0.0
        %1990 = vmatprep.subr.mxu0 0.0
        %1991 = vmatpush1.msra.mxu0 0.0
        %1992 = vmatprep.subr.mxu0 0.0
        %1993 = vmatpush1.msra.mxu0 0.0
        %1994 = vmatprep.subr.mxu0 0.0
        %1995 = vmatpush1.msra.mxu0 0.0
        %1996 = vmatprep.subr.mxu0 0.0
        %1997 = vmatpush1.msra.mxu0 0.0
        %1998 = vmatprep.subr.mxu0 0.0
        %1999 = vmatpush1.msra.mxu0 0.0
        %2000 = vmatprep.subr.mxu0 0.0
        %2001 = vmatpush1.msra.mxu0 0.0
        %2002 = vmatprep.subr.mxu0 0.0
        %2003 = vmatpush1.msra.mxu0 0.0
        %2004 = vmatprep.subr.mxu0 0.0
        %2005 = vmatpush1.msra.mxu0 0.0
        %2006 = vmatprep.subr.mxu0 0.0
        %2007 = vmatpush1.msra.mxu0 0.0
        %2008 = vmatprep.subr.mxu0 0.0
        %2009 = vmatpush1.msra.mxu0 0.0
        %2010 = vmatprep.subr.mxu0 0.0
        %2011 = vmatpush1.msra.mxu0 0.0
        %2012 = vmatprep.subr.mxu0 0.0
        %2013 = vmatpush1.msra.mxu0 0.0
        %2014 = vmatprep.subr.mxu0 0.0
        %2015 = vmatpush1.msra.mxu0 0.0
        %2016 = vmatprep.subr.mxu0 0.0
        %2017 = vmatpush1.msra.mxu0 0.0
        %2018 = vmatprep.mubr.f32.mxu0 0.0
        %2019 = vmatmul.mubr.f32.gmra.mrb[0].mxu0 %v1952
        %v2020 = vpop.f32.mrb[0].mxu0
        %v2021 = vadd.f32 0.0, %v2020
        %v2022 = vpop.f32.mrb[0].mxu0
        %v2023 = vadd.f32 0.0, %v2022
        %2024 = vdwg.mxu0
        %v2025 = vadd.f32 %v1941, %v2021
        %v2026 = vadd.f32 %v1942, %v2023
        %2027 = vrot.lane.b32.xlu0 %v1858, 126
        %v2028 = vpop.permute.xlu0 %2027
        %2029 = vrot.lane.b32.xlu0 %v1859, 126
        %v2030 = vpop.permute.xlu0 %2029
        %v2031 = vsel %vm467, %v2028, %v2030
        %v2032 = vsel %vm467, %v2030, %v2028
        %s2033 = scalar_lea.vmem %s5, 16
        %v2034 = vld [vmem:[%s2033] sm:$0x3f]
        %v2036 = vsel %vm1109, %v2034, 0
        %2038 = vmatprep.subr.mxu0 %v2032
        %2039 = vmatpush1.msra.mxu0 %v2031
        %2040 = vmatprep.subr.mxu0 0.0
        %2041 = vmatpush1.msra.mxu0 0.0
        %2042 = vmatprep.subr.mxu0 0.0
        %2043 = vmatpush1.msra.mxu0 0.0
        %2044 = vmatprep.subr.mxu0 0.0
        %2045 = vmatpush1.msra.mxu0 0.0
        %2046 = vmatprep.subr.mxu0 0.0
        %2047 = vmatpush1.msra.mxu0 0.0
        %2048 = vmatprep.subr.mxu0 0.0
        %2049 = vmatpush1.msra.mxu0 0.0
        %2050 = vmatprep.subr.mxu0 0.0
        %2051 = vmatpush1.msra.mxu0 0.0
        %2052 = vmatprep.subr.mxu0 0.0
        %2053 = vmatpush1.msra.mxu0 0.0
        %2054 = vmatprep.subr.mxu0 0.0
        %2055 = vmatpush1.msra.mxu0 0.0
        %2056 = vmatprep.subr.mxu0 0.0
        %2057 = vmatpush1.msra.mxu0 0.0
        %2058 = vmatprep.subr.mxu0 0.0
        %2059 = vmatpush1.msra.mxu0 0.0
        %2060 = vmatprep.subr.mxu0 0.0
        %2061 = vmatpush1.msra.mxu0 0.0
        %2062 = vmatprep.subr.mxu0 0.0
        %2063 = vmatpush1.msra.mxu0 0.0
        %2064 = vmatprep.subr.mxu0 0.0
        %2065 = vmatpush1.msra.mxu0 0.0
        %2066 = vmatprep.subr.mxu0 0.0
        %2067 = vmatpush1.msra.mxu0 0.0
        %2068 = vmatprep.subr.mxu0 0.0
        %2069 = vmatpush1.msra.mxu0 0.0
        %2070 = vmatprep.subr.mxu0 0.0
        %2071 = vmatpush1.msra.mxu0 0.0
        %2072 = vmatprep.subr.mxu0 0.0
        %2073 = vmatpush1.msra.mxu0 0.0
        %2074 = vmatprep.subr.mxu0 0.0
        %2075 = vmatpush1.msra.mxu0 0.0
        %2076 = vmatprep.subr.mxu0 0.0
        %2077 = vmatpush1.msra.mxu0 0.0
        %2078 = vmatprep.subr.mxu0 0.0
        %2079 = vmatpush1.msra.mxu0 0.0
        %2080 = vmatprep.subr.mxu0 0.0
        %2081 = vmatpush1.msra.mxu0 0.0
        %2082 = vmatprep.subr.mxu0 0.0
        %2083 = vmatpush1.msra.mxu0 0.0
        %2084 = vmatprep.subr.mxu0 0.0
        %2085 = vmatpush1.msra.mxu0 0.0
        %2086 = vmatprep.subr.mxu0 0.0
        %2087 = vmatpush1.msra.mxu0 0.0
        %2088 = vmatprep.subr.mxu0 0.0
        %2089 = vmatpush1.msra.mxu0 0.0
        %2090 = vmatprep.subr.mxu0 0.0
        %2091 = vmatpush1.msra.mxu0 0.0
        %2092 = vmatprep.subr.mxu0 0.0
        %2093 = vmatpush1.msra.mxu0 0.0
        %2094 = vmatprep.subr.mxu0 0.0
        %2095 = vmatpush1.msra.mxu0 0.0
        %2096 = vmatprep.subr.mxu0 0.0
        %2097 = vmatpush1.msra.mxu0 0.0
        %2098 = vmatprep.subr.mxu0 0.0
        %2099 = vmatpush1.msra.mxu0 0.0
        %2100 = vmatprep.subr.mxu0 0.0
        %2101 = vmatpush1.msra.mxu0 0.0
        %2102 = vmatprep.mubr.f32.mxu0 0.0
        %2103 = vmatmul.mubr.f32.gmra.mrb[0].mxu0 %v2036
        %v2104 = vpop.f32.mrb[0].mxu0
        %v2105 = vadd.f32 0.0, %v2104
        %v2106 = vpop.f32.mrb[0].mxu0
        %v2107 = vadd.f32 0.0, %v2106
        %2108 = vdwg.mxu0
        %v2109 = vadd.f32 %v2025, %v2105
        %v2110 = vadd.f32 %v2026, %v2107
        %2111 = vrot.lane.b32.xlu0 %v1858, 112
        %v2112 = vpop.permute.xlu0 %2111
        %2113 = vrot.lane.b32.xlu0 %v1859, 112
        %v2114 = vpop.permute.xlu0 %2113
        %v2115 = vsel %vm558, %v2112, %v2114
        %v2116 = vsel %vm558, %v2114, %v2112
        %s2117 = scalar_lea.vmem %s5, 24
        %v2118 = vld [vmem:[%s2117] sm:$0x3f]
        %v2120 = vsel %vm1109, %v2118, 0
        %2122 = vmatprep.subr.mxu0 %v2116
        %2123 = vmatpush1.msra.mxu0 %v2115
        %2124 = vmatprep.subr.mxu0 0.0
        %2125 = vmatpush1.msra.mxu0 0.0
        %2126 = vmatprep.subr.mxu0 0.0
        %2127 = vmatpush1.msra.mxu0 0.0
        %2128 = vmatprep.subr.mxu0 0.0
        %2129 = vmatpush1.msra.mxu0 0.0
        %2130 = vmatprep.subr.mxu0 0.0
        %2131 = vmatpush1.msra.mxu0 0.0
        %2132 = vmatprep.subr.mxu0 0.0
        %2133 = vmatpush1.msra.mxu0 0.0
        %2134 = vmatprep.subr.mxu0 0.0
        %2135 = vmatpush1.msra.mxu0 0.0
        %2136 = vmatprep.subr.mxu0 0.0
        %2137 = vmatpush1.msra.mxu0 0.0
        %2138 = vmatprep.subr.mxu0 0.0
        %2139 = vmatpush1.msra.mxu0 0.0
        %2140 = vmatprep.subr.mxu0 0.0
        %2141 = vmatpush1.msra.mxu0 0.0
        %2142 = vmatprep.subr.mxu0 0.0
        %2143 = vmatpush1.msra.mxu0 0.0
        %2144 = vmatprep.subr.mxu0 0.0
        %2145 = vmatpush1.msra.mxu0 0.0
        %2146 = vmatprep.subr.mxu0 0.0
        %2147 = vmatpush1.msra.mxu0 0.0
        %2148 = vmatprep.subr.mxu0 0.0
        %2149 = vmatpush1.msra.mxu0 0.0
        %2150 = vmatprep.subr.mxu0 0.0
        %2151 = vmatpush1.msra.mxu0 0.0
        %2152 = vmatprep.subr.mxu0 0.0
        %2153 = vmatpush1.msra.mxu0 0.0
        %2154 = vmatprep.subr.mxu0 0.0
        %2155 = vmatpush1.msra.mxu0 0.0
        %2156 = vmatprep.subr.mxu0 0.0
        %2157 = vmatpush1.msra.mxu0 0.0
        %2158 = vmatprep.subr.mxu0 0.0
        %2159 = vmatpush1.msra.mxu0 0.0
        %2160 = vmatprep.subr.mxu0 0.0
        %2161 = vmatpush1.msra.mxu0 0.0
        %2162 = vmatprep.subr.mxu0 0.0
        %2163 = vmatpush1.msra.mxu0 0.0
        %2164 = vmatprep.subr.mxu0 0.0
        %2165 = vmatpush1.msra.mxu0 0.0
        %2166 = vmatprep.subr.mxu0 0.0
        %2167 = vmatpush1.msra.mxu0 0.0
        %2168 = vmatprep.subr.mxu0 0.0
        %2169 = vmatpush1.msra.mxu0 0.0
        %2170 = vmatprep.subr.mxu0 0.0
        %2171 = vmatpush1.msra.mxu0 0.0
        %2172 = vmatprep.subr.mxu0 0.0
        %2173 = vmatpush1.msra.mxu0 0.0
        %2174 = vmatprep.subr.mxu0 0.0
        %2175 = vmatpush1.msra.mxu0 0.0
        %2176 = vmatprep.subr.mxu0 0.0
        %2177 = vmatpush1.msra.mxu0 0.0
        %2178 = vmatprep.subr.mxu0 0.0
        %2179 = vmatpush1.msra.mxu0 0.0
        %2180 = vmatprep.subr.mxu0 0.0
        %2181 = vmatpush1.msra.mxu0 0.0
        %2182 = vmatprep.subr.mxu0 0.0
        %2183 = vmatpush1.msra.mxu0 0.0
        %2184 = vmatprep.subr.mxu0 0.0
        %2185 = vmatpush1.msra.mxu0 0.0
        %2186 = vmatprep.mubr.f32.mxu0 0.0
        %2187 = vmatmul.mubr.f32.gmra.mrb[0].mxu0 %v2120
        %v2188 = vpop.f32.mrb[0].mxu0
        %v2189 = vadd.f32 0.0, %v2188
        %v2190 = vpop.f32.mrb[0].mxu0
        %v2191 = vadd.f32 0.0, %v2190
        %2192 = vdwg.mxu0
        %v2193 = vadd.f32 %v2109, %v2189
        %v2194 = vadd.f32 %v2110, %v2191
        %2195 = vrot.lane.b32.xlu0 %v1858, 111
        %v2196 = vpop.permute.xlu0 %2195
        %2197 = vrot.lane.b32.xlu0 %v1859, 111
        %v2198 = vpop.permute.xlu0 %2197
        %v2199 = vsel %vm649, %v2196, %v2198
        %v2200 = vsel %vm649, %v2198, %v2196
        %s2201 = scalar_lea.vmem %s5, 32
        %v2202 = vld [vmem:[%s2201] sm:$0x3f]
        %v2204 = vsel %vm1109, %v2202, 0
        %2206 = vmatprep.subr.mxu0 %v2200
        %2207 = vmatpush1.msra.mxu0 %v2199
        %2208 = vmatprep.subr.mxu0 0.0
        %2209 = vmatpush1.msra.mxu0 0.0
        %2210 = vmatprep.subr.mxu0 0.0
        %2211 = vmatpush1.msra.mxu0 0.0
        %2212 = vmatprep.subr.mxu0 0.0
        %2213 = vmatpush1.msra.mxu0 0.0
        %2214 = vmatprep.subr.mxu0 0.0
        %2215 = vmatpush1.msra.mxu0 0.0
        %2216 = vmatprep.subr.mxu0 0.0
        %2217 = vmatpush1.msra.mxu0 0.0
        %2218 = vmatprep.subr.mxu0 0.0
        %2219 = vmatpush1.msra.mxu0 0.0
        %2220 = vmatprep.subr.mxu0 0.0
        %2221 = vmatpush1.msra.mxu0 0.0
        %2222 = vmatprep.subr.mxu0 0.0
        %2223 = vmatpush1.msra.mxu0 0.0
        %2224 = vmatprep.subr.mxu0 0.0
        %2225 = vmatpush1.msra.mxu0 0.0
        %2226 = vmatprep.subr.mxu0 0.0
        %2227 = vmatpush1.msra.mxu0 0.0
        %2228 = vmatprep.subr.mxu0 0.0
        %2229 = vmatpush1.msra.mxu0 0.0
        %2230 = vmatprep.subr.mxu0 0.0
        %2231 = vmatpush1.msra.mxu0 0.0
        %2232 = vmatprep.subr.mxu0 0.0
        %2233 = vmatpush1.msra.mxu0 0.0
        %2234 = vmatprep.subr.mxu0 0.0
        %2235 = vmatpush1.msra.mxu0 0.0
        %2236 = vmatprep.subr.mxu0 0.0
        %2237 = vmatpush1.msra.mxu0 0.0
        %2238 = vmatprep.subr.mxu0 0.0
        %2239 = vmatpush1.msra.mxu0 0.0
        %2240 = vmatprep.subr.mxu0 0.0
        %2241 = vmatpush1.msra.mxu0 0.0
        %2242 = vmatprep.subr.mxu0 0.0
        %2243 = vmatpush1.msra.mxu0 0.0
        %2244 = vmatprep.subr.mxu0 0.0
        %2245 = vmatpush1.msra.mxu0 0.0
        %2246 = vmatprep.subr.mxu0 0.0
        %2247 = vmatpush1.msra.mxu0 0.0
        %2248 = vmatprep.subr.mxu0 0.0
        %2249 = vmatpush1.msra.mxu0 0.0
        %2250 = vmatprep.subr.mxu0 0.0
        %2251 = vmatpush1.msra.mxu0 0.0
        %2252 = vmatprep.subr.mxu0 0.0
        %2253 = vmatpush1.msra.mxu0 0.0
        %2254 = vmatprep.subr.mxu0 0.0
        %2255 = vmatpush1.msra.mxu0 0.0
        %2256 = vmatprep.subr.mxu0 0.0
        %2257 = vmatpush1.msra.mxu0 0.0
        %2258 = vmatprep.subr.mxu0 0.0
        %2259 = vmatpush1.msra.mxu0 0.0
        %2260 = vmatprep.subr.mxu0 0.0
        %2261 = vmatpush1.msra.mxu0 0.0
        %2262 = vmatprep.subr.mxu0 0.0
        %2263 = vmatpush1.msra.mxu0 0.0
        %2264 = vmatprep.subr.mxu0 0.0
        %2265 = vmatpush1.msra.mxu0 0.0
        %2266 = vmatprep.subr.mxu0 0.0
        %2267 = vmatpush1.msra.mxu0 0.0
        %2268 = vmatprep.subr.mxu0 0.0
        %2269 = vmatpush1.msra.mxu0 0.0
        %2270 = vmatprep.mubr.f32.mxu0 0.0
        %2271 = vmatmul.mubr.f32.gmra.mrb[0].mxu0 %v2204
        %v2272 = vpop.f32.mrb[0].mxu0
        %v2273 = vadd.f32 0.0, %v2272
        %v2274 = vpop.f32.mrb[0].mxu0
        %v2275 = vadd.f32 0.0, %v2274
        %2276 = vdwg.mxu0
        %v2277 = vadd.f32 %v2193, %v2273
        %v2278 = vadd.f32 %v2194, %v2275
        %2279 = vrot.lane.b32.xlu0 %v1858, 110
        %v2280 = vpop.permute.xlu0 %2279
        %2281 = vrot.lane.b32.xlu0 %v1859, 110
        %v2282 = vpop.permute.xlu0 %2281
        %v2283 = vsel %vm740, %v2280, %v2282
        %v2284 = vsel %vm740, %v2282, %v2280
        %s2285 = scalar_lea.vmem %s5, 40
        %v2286 = vld [vmem:[%s2285] sm:$0x3f]
        %v2288 = vsel %vm1109, %v2286, 0
        %2290 = vmatprep.subr.mxu0 %v2284
        %2291 = vmatpush1.msra.mxu0 %v2283
        %2292 = vmatprep.subr.mxu0 0.0
        %2293 = vmatpush1.msra.mxu0 0.0
        %2294 = vmatprep.subr.mxu0 0.0
        %2295 = vmatpush1.msra.mxu0 0.0
        %2296 = vmatprep.subr.mxu0 0.0
        %2297 = vmatpush1.msra.mxu0 0.0
        %2298 = vmatprep.subr.mxu0 0.0
        %2299 = vmatpush1.msra.mxu0 0.0
        %2300 = vmatprep.subr.mxu0 0.0
        %2301 = vmatpush1.msra.mxu0 0.0
        %2302 = vmatprep.subr.mxu0 0.0
        %2303 = vmatpush1.msra.mxu0 0.0
        %2304 = vmatprep.subr.mxu0 0.0
        %2305 = vmatpush1.msra.mxu0 0.0
        %2306 = vmatprep.subr.mxu0 0.0
        %2307 = vmatpush1.msra.mxu0 0.0
        %2308 = vmatprep.subr.mxu0 0.0
        %2309 = vmatpush1.msra.mxu0 0.0
        %2310 = vmatprep.subr.mxu0 0.0
        %2311 = vmatpush1.msra.mxu0 0.0
        %2312 = vmatprep.subr.mxu0 0.0
        %2313 = vmatpush1.msra.mxu0 0.0
        %2314 = vmatprep.subr.mxu0 0.0
        %2315 = vmatpush1.msra.mxu0 0.0
        %2316 = vmatprep.subr.mxu0 0.0
        %2317 = vmatpush1.msra.mxu0 0.0
        %2318 = vmatprep.subr.mxu0 0.0
        %2319 = vmatpush1.msra.mxu0 0.0
        %2320 = vmatprep.subr.mxu0 0.0
        %2321 = vmatpush1.msra.mxu0 0.0
        %2322 = vmatprep.subr.mxu0 0.0
        %2323 = vmatpush1.msra.mxu0 0.0
        %2324 = vmatprep.subr.mxu0 0.0
        %2325 = vmatpush1.msra.mxu0 0.0
        %2326 = vmatprep.subr.mxu0 0.0
        %2327 = vmatpush1.msra.mxu0 0.0
        %2328 = vmatprep.subr.mxu0 0.0
        %2329 = vmatpush1.msra.mxu0 0.0
        %2330 = vmatprep.subr.mxu0 0.0
        %2331 = vmatpush1.msra.mxu0 0.0
        %2332 = vmatprep.subr.mxu0 0.0
        %2333 = vmatpush1.msra.mxu0 0.0
        %2334 = vmatprep.subr.mxu0 0.0
        %2335 = vmatpush1.msra.mxu0 0.0
        %2336 = vmatprep.subr.mxu0 0.0
        %2337 = vmatpush1.msra.mxu0 0.0
        %2338 = vmatprep.subr.mxu0 0.0
        %2339 = vmatpush1.msra.mxu0 0.0
        %2340 = vmatprep.subr.mxu0 0.0
        %2341 = vmatpush1.msra.mxu0 0.0
        %2342 = vmatprep.subr.mxu0 0.0
        %2343 = vmatpush1.msra.mxu0 0.0
        %2344 = vmatprep.subr.mxu0 0.0
        %2345 = vmatpush1.msra.mxu0 0.0
        %2346 = vmatprep.subr.mxu0 0.0
        %2347 = vmatpush1.msra.mxu0 0.0
        %2348 = vmatprep.subr.mxu0 0.0
        %2349 = vmatpush1.msra.mxu0 0.0
        %2350 = vmatprep.subr.mxu0 0.0
        %2351 = vmatpush1.msra.mxu0 0.0
        %2352 = vmatprep.subr.mxu0 0.0
        %2353 = vmatpush1.msra.mxu0 0.0
        %2354 = vmatprep.mubr.f32.mxu0 0.0
        %2355 = vmatmul.mubr.f32.gmra.mrb[0].mxu0 %v2288
        %v2356 = vpop.f32.mrb[0].mxu0
        %v2357 = vadd.f32 0.0, %v2356
        %v2358 = vpop.f32.mrb[0].mxu0
        %v2359 = vadd.f32 0.0, %v2358
        %2360 = vdwg.mxu0
        %v2361 = vadd.f32 %v2277, %v2357
        %v2362 = vadd.f32 %v2278, %v2359
        %2363 = vrot.lane.b32.xlu0 %v1858, 96
        %v2364 = vpop.permute.xlu0 %2363
        %2365 = vrot.lane.b32.xlu0 %v1859, 96
        %v2366 = vpop.permute.xlu0 %2365
        %v2367 = vsel %vm831, %v2364, %v2366
        %v2368 = vsel %vm831, %v2366, %v2364
        %s2369 = scalar_lea.vmem %s5, 48
        %v2370 = vld [vmem:[%s2369] sm:$0x3f]
        %v2372 = vsel %vm1109, %v2370, 0
        %2374 = vmatprep.subr.mxu0 %v2368
        %2375 = vmatpush1.msra.mxu0 %v2367
        %2376 = vmatprep.subr.mxu0 0.0
        %2377 = vmatpush1.msra.mxu0 0.0
        %2378 = vmatprep.subr.mxu0 0.0
        %2379 = vmatpush1.msra.mxu0 0.0
        %2380 = vmatprep.subr.mxu0 0.0
        %2381 = vmatpush1.msra.mxu0 0.0
        %2382 = vmatprep.subr.mxu0 0.0
        %2383 = vmatpush1.msra.mxu0 0.0
        %2384 = vmatprep.subr.mxu0 0.0
        %2385 = vmatpush1.msra.mxu0 0.0
        %2386 = vmatprep.subr.mxu0 0.0
        %2387 = vmatpush1.msra.mxu0 0.0
        %2388 = vmatprep.subr.mxu0 0.0
        %2389 = vmatpush1.msra.mxu0 0.0
        %2390 = vmatprep.subr.mxu0 0.0
        %2391 = vmatpush1.msra.mxu0 0.0
        %2392 = vmatprep.subr.mxu0 0.0
        %2393 = vmatpush1.msra.mxu0 0.0
        %2394 = vmatprep.subr.mxu0 0.0
        %2395 = vmatpush1.msra.mxu0 0.0
        %2396 = vmatprep.subr.mxu0 0.0
        %2397 = vmatpush1.msra.mxu0 0.0
        %2398 = vmatprep.subr.mxu0 0.0
        %2399 = vmatpush1.msra.mxu0 0.0
        %2400 = vmatprep.subr.mxu0 0.0
        %2401 = vmatpush1.msra.mxu0 0.0
        %2402 = vmatprep.subr.mxu0 0.0
        %2403 = vmatpush1.msra.mxu0 0.0
        %2404 = vmatprep.subr.mxu0 0.0
        %2405 = vmatpush1.msra.mxu0 0.0
        %2406 = vmatprep.subr.mxu0 0.0
        %2407 = vmatpush1.msra.mxu0 0.0
        %2408 = vmatprep.subr.mxu0 0.0
        %2409 = vmatpush1.msra.mxu0 0.0
        %2410 = vmatprep.subr.mxu0 0.0
        %2411 = vmatpush1.msra.mxu0 0.0
        %2412 = vmatprep.subr.mxu0 0.0
        %2413 = vmatpush1.msra.mxu0 0.0
        %2414 = vmatprep.subr.mxu0 0.0
        %2415 = vmatpush1.msra.mxu0 0.0
        %2416 = vmatprep.subr.mxu0 0.0
        %2417 = vmatpush1.msra.mxu0 0.0
        %2418 = vmatprep.subr.mxu0 0.0
        %2419 = vmatpush1.msra.mxu0 0.0
        %2420 = vmatprep.subr.mxu0 0.0
        %2421 = vmatpush1.msra.mxu0 0.0
        %2422 = vmatprep.subr.mxu0 0.0
        %2423 = vmatpush1.msra.mxu0 0.0
        %2424 = vmatprep.subr.mxu0 0.0
        %2425 = vmatpush1.msra.mxu0 0.0
        %2426 = vmatprep.subr.mxu0 0.0
        %2427 = vmatpush1.msra.mxu0 0.0
        %2428 = vmatprep.subr.mxu0 0.0
        %2429 = vmatpush1.msra.mxu0 0.0
        %2430 = vmatprep.subr.mxu0 0.0
        %2431 = vmatpush1.msra.mxu0 0.0
        %2432 = vmatprep.subr.mxu0 0.0
        %2433 = vmatpush1.msra.mxu0 0.0
        %2434 = vmatprep.subr.mxu0 0.0
        %2435 = vmatpush1.msra.mxu0 0.0
        %2436 = vmatprep.subr.mxu0 0.0
        %2437 = vmatpush1.msra.mxu0 0.0
        %2438 = vmatprep.mubr.f32.mxu0 0.0
        %2439 = vmatmul.mubr.f32.gmra.mrb[0].mxu0 %v2372
        %v2440 = vpop.f32.mrb[0].mxu0
        %v2441 = vadd.f32 0.0, %v2440
        %v2442 = vpop.f32.mrb[0].mxu0
        %v2443 = vadd.f32 0.0, %v2442
        %2444 = vdwg.mxu0
        %v2445 = vadd.f32 %v2361, %v2441
        %v2446 = vadd.f32 %v2362, %v2443
        %2447 = vrot.lane.b32.xlu0 %v1858, 95
        %v2448 = vpop.permute.xlu0 %2447
        %2449 = vrot.lane.b32.xlu0 %v1859, 95
        %v2450 = vpop.permute.xlu0 %2449
        %v2451 = vsel %vm922, %v2448, %v2450
        %v2452 = vsel %vm922, %v2450, %v2448
        %s2453 = scalar_lea.vmem %s5, 56
        %v2454 = vld [vmem:[%s2453] sm:$0x3f]
        %v2456 = vsel %vm1109, %v2454, 0
        %2458 = vmatprep.subr.mxu0 %v2452
        %2459 = vmatpush1.msra.mxu0 %v2451
        %2460 = vmatprep.subr.mxu0 0.0
        %2461 = vmatpush1.msra.mxu0 0.0
        %2462 = vmatprep.subr.mxu0 0.0
        %2463 = vmatpush1.msra.mxu0 0.0
        %2464 = vmatprep.subr.mxu0 0.0
        %2465 = vmatpush1.msra.mxu0 0.0
        %2466 = vmatprep.subr.mxu0 0.0
        %2467 = vmatpush1.msra.mxu0 0.0
        %2468 = vmatprep.subr.mxu0 0.0
        %2469 = vmatpush1.msra.mxu0 0.0
        %2470 = vmatprep.subr.mxu0 0.0
        %2471 = vmatpush1.msra.mxu0 0.0
        %2472 = vmatprep.subr.mxu0 0.0
        %2473 = vmatpush1.msra.mxu0 0.0
        %2474 = vmatprep.subr.mxu0 0.0
        %2475 = vmatpush1.msra.mxu0 0.0
        %2476 = vmatprep.subr.mxu0 0.0
        %2477 = vmatpush1.msra.mxu0 0.0
        %2478 = vmatprep.subr.mxu0 0.0
        %2479 = vmatpush1.msra.mxu0 0.0
        %2480 = vmatprep.subr.mxu0 0.0
        %2481 = vmatpush1.msra.mxu0 0.0
        %2482 = vmatprep.subr.mxu0 0.0
        %2483 = vmatpush1.msra.mxu0 0.0
        %2484 = vmatprep.subr.mxu0 0.0
        %2485 = vmatpush1.msra.mxu0 0.0
        %2486 = vmatprep.subr.mxu0 0.0
        %2487 = vmatpush1.msra.mxu0 0.0
        %2488 = vmatprep.subr.mxu0 0.0
        %2489 = vmatpush1.msra.mxu0 0.0
        %2490 = vmatprep.subr.mxu0 0.0
        %2491 = vmatpush1.msra.mxu0 0.0
        %2492 = vmatprep.subr.mxu0 0.0
        %2493 = vmatpush1.msra.mxu0 0.0
        %2494 = vmatprep.subr.mxu0 0.0
        %2495 = vmatpush1.msra.mxu0 0.0
        %2496 = vmatprep.subr.mxu0 0.0
        %2497 = vmatpush1.msra.mxu0 0.0
        %2498 = vmatprep.subr.mxu0 0.0
        %2499 = vmatpush1.msra.mxu0 0.0
        %2500 = vmatprep.subr.mxu0 0.0
        %2501 = vmatpush1.msra.mxu0 0.0
        %2502 = vmatprep.subr.mxu0 0.0
        %2503 = vmatpush1.msra.mxu0 0.0
        %2504 = vmatprep.subr.mxu0 0.0
        %2505 = vmatpush1.msra.mxu0 0.0
        %2506 = vmatprep.subr.mxu0 0.0
        %2507 = vmatpush1.msra.mxu0 0.0
        %2508 = vmatprep.subr.mxu0 0.0
        %2509 = vmatpush1.msra.mxu0 0.0
        %2510 = vmatprep.subr.mxu0 0.0
        %2511 = vmatpush1.msra.mxu0 0.0
        %2512 = vmatprep.subr.mxu0 0.0
        %2513 = vmatpush1.msra.mxu0 0.0
        %2514 = vmatprep.subr.mxu0 0.0
        %2515 = vmatpush1.msra.mxu0 0.0
        %2516 = vmatprep.subr.mxu0 0.0
        %2517 = vmatpush1.msra.mxu0 0.0
        %2518 = vmatprep.subr.mxu0 0.0
        %2519 = vmatpush1.msra.mxu0 0.0
        %2520 = vmatprep.subr.mxu0 0.0
        %2521 = vmatpush1.msra.mxu0 0.0
        %2522 = vmatprep.mubr.f32.mxu0 0.0
        %2523 = vmatmul.mubr.f32.gmra.mrb[0].mxu0 %v2456
        %v2524 = vpop.f32.mrb[0].mxu0
        %v2525 = vadd.f32 0.0, %v2524
        %v2526 = vpop.f32.mrb[0].mxu0
        %v2527 = vadd.f32 0.0, %v2526
        %2528 = vdwg.mxu0
        %v2529 = vadd.f32 %v2445, %v2525
        %v2530 = vadd.f32 %v2446, %v2527
        %2531 = vrot.lane.b32.xlu0 %v1858, 94
        %v2532 = vpop.permute.xlu0 %2531
        %2533 = vrot.lane.b32.xlu0 %v1859, 94
        %v2534 = vpop.permute.xlu0 %2533
        %v2535 = vsel %vm1013, %v2532, %v2534
        %v2536 = vsel %vm1013, %v2534, %v2532
        %s2537 = scalar_lea.vmem %s5, 64
        %v2538 = vld [vmem:[%s2537] sm:$0x3f]
        %v2540 = vsel %vm1109, %v2538, 0
        %2542 = vmatprep.subr.mxu0 %v2536
        %2543 = vmatpush1.msra.mxu0 %v2535
        %2544 = vmatprep.subr.mxu0 0.0
        %2545 = vmatpush1.msra.mxu0 0.0
        %2546 = vmatprep.subr.mxu0 0.0
        %2547 = vmatpush1.msra.mxu0 0.0
        %2548 = vmatprep.subr.mxu0 0.0
        %2549 = vmatpush1.msra.mxu0 0.0
        %2550 = vmatprep.subr.mxu0 0.0
        %2551 = vmatpush1.msra.mxu0 0.0
        %2552 = vmatprep.subr.mxu0 0.0
        %2553 = vmatpush1.msra.mxu0 0.0
        %2554 = vmatprep.subr.mxu0 0.0
        %2555 = vmatpush1.msra.mxu0 0.0
        %2556 = vmatprep.subr.mxu0 0.0
        %2557 = vmatpush1.msra.mxu0 0.0
        %2558 = vmatprep.subr.mxu0 0.0
        %2559 = vmatpush1.msra.mxu0 0.0
        %2560 = vmatprep.subr.mxu0 0.0
        %2561 = vmatpush1.msra.mxu0 0.0
        %2562 = vmatprep.subr.mxu0 0.0
        %2563 = vmatpush1.msra.mxu0 0.0
        %2564 = vmatprep.subr.mxu0 0.0
        %2565 = vmatpush1.msra.mxu0 0.0
        %2566 = vmatprep.subr.mxu0 0.0
        %2567 = vmatpush1.msra.mxu0 0.0
        %2568 = vmatprep.subr.mxu0 0.0
        %2569 = vmatpush1.msra.mxu0 0.0
        %2570 = vmatprep.subr.mxu0 0.0
        %2571 = vmatpush1.msra.mxu0 0.0
        %2572 = vmatprep.subr.mxu0 0.0
        %2573 = vmatpush1.msra.mxu0 0.0
        %2574 = vmatprep.subr.mxu0 0.0
        %2575 = vmatpush1.msra.mxu0 0.0
        %2576 = vmatprep.subr.mxu0 0.0
        %2577 = vmatpush1.msra.mxu0 0.0
        %2578 = vmatprep.subr.mxu0 0.0
        %2579 = vmatpush1.msra.mxu0 0.0
        %2580 = vmatprep.subr.mxu0 0.0
        %2581 = vmatpush1.msra.mxu0 0.0
        %2582 = vmatprep.subr.mxu0 0.0
        %2583 = vmatpush1.msra.mxu0 0.0
        %2584 = vmatprep.subr.mxu0 0.0
        %2585 = vmatpush1.msra.mxu0 0.0
        %2586 = vmatprep.subr.mxu0 0.0
        %2587 = vmatpush1.msra.mxu0 0.0
        %2588 = vmatprep.subr.mxu0 0.0
        %2589 = vmatpush1.msra.mxu0 0.0
        %2590 = vmatprep.subr.mxu0 0.0
        %2591 = vmatpush1.msra.mxu0 0.0
        %2592 = vmatprep.subr.mxu0 0.0
        %2593 = vmatpush1.msra.mxu0 0.0
        %2594 = vmatprep.subr.mxu0 0.0
        %2595 = vmatpush1.msra.mxu0 0.0
        %2596 = vmatprep.subr.mxu0 0.0
        %2597 = vmatpush1.msra.mxu0 0.0
        %2598 = vmatprep.subr.mxu0 0.0
        %2599 = vmatpush1.msra.mxu0 0.0
        %2600 = vmatprep.subr.mxu0 0.0
        %2601 = vmatpush1.msra.mxu0 0.0
        %2602 = vmatprep.subr.mxu0 0.0
        %2603 = vmatpush1.msra.mxu0 0.0
        %2604 = vmatprep.subr.mxu0 0.0
        %2605 = vmatpush1.msra.mxu0 0.0
        %2606 = vmatprep.mubr.f32.mxu0 0.0
        %2607 = vmatmul.mubr.f32.gmra.mrb[0].mxu0 %v2540
        %v2608 = vpop.f32.mrb[0].mxu0
        %v2609 = vadd.f32 0.0, %v2608
        %v2610 = vpop.f32.mrb[0].mxu0
        %v2611 = vadd.f32 0.0, %v2610
        %2612 = vdwg.mxu0
        %v2613 = vadd.f32 %v2529, %v2609
        %v2614 = vadd.f32 %v2530, %v2611
        %vm2615 = vcmask 48128
        %v2617 = vsel %vm2615, 0.16666667, 0
        %vm2619 = vcmask 1045504
        %v2621 = vsel %vm2619, %v2613, 0
        %v2624 = vsel %vm2619, %v2614, 0
        %2626 = vmatprep.subr.mxu0 %v2624
        %2627 = vmatpush1.msra.mxu0 %v2621
        %2628 = vmatprep.subr.mxu0 0.0
        %2629 = vmatpush1.msra.mxu0 0.0
        %2630 = vmatprep.subr.mxu0 0.0
        %2631 = vmatpush1.msra.mxu0 0.0
        %2632 = vmatprep.subr.mxu0 0.0
        %2633 = vmatpush1.msra.mxu0 0.0
        %2634 = vmatprep.subr.mxu0 0.0
        %2635 = vmatpush1.msra.mxu0 0.0
        %2636 = vmatprep.subr.mxu0 0.0
        %2637 = vmatpush1.msra.mxu0 0.0
        %2638 = vmatprep.subr.mxu0 0.0
        %2639 = vmatpush1.msra.mxu0 0.0
        %2640 = vmatprep.subr.mxu0 0.0
        %2641 = vmatpush1.msra.mxu0 0.0
        %2642 = vmatprep.subr.mxu0 0.0
        %2643 = vmatpush1.msra.mxu0 0.0
        %2644 = vmatprep.subr.mxu0 0.0
        %2645 = vmatpush1.msra.mxu0 0.0
        %2646 = vmatprep.subr.mxu0 0.0
        %2647 = vmatpush1.msra.mxu0 0.0
        %2648 = vmatprep.subr.mxu0 0.0
        %2649 = vmatpush1.msra.mxu0 0.0
        %2650 = vmatprep.subr.mxu0 0.0
        %2651 = vmatpush1.msra.mxu0 0.0
        %2652 = vmatprep.subr.mxu0 0.0
        %2653 = vmatpush1.msra.mxu0 0.0
        %2654 = vmatprep.subr.mxu0 0.0
        %2655 = vmatpush1.msra.mxu0 0.0
        %2656 = vmatprep.subr.mxu0 0.0
        %2657 = vmatpush1.msra.mxu0 0.0
        %2658 = vmatprep.subr.mxu0 0.0
        %2659 = vmatpush1.msra.mxu0 0.0
        %2660 = vmatprep.subr.mxu0 0.0
        %2661 = vmatpush1.msra.mxu0 0.0
        %2662 = vmatprep.subr.mxu0 0.0
        %2663 = vmatpush1.msra.mxu0 0.0
        %2664 = vmatprep.subr.mxu0 0.0
        %2665 = vmatpush1.msra.mxu0 0.0
        %2666 = vmatprep.subr.mxu0 0.0
        %2667 = vmatpush1.msra.mxu0 0.0
        %2668 = vmatprep.subr.mxu0 0.0
        %2669 = vmatpush1.msra.mxu0 0.0
        %2670 = vmatprep.subr.mxu0 0.0
        %2671 = vmatpush1.msra.mxu0 0.0
        %2672 = vmatprep.subr.mxu0 0.0
        %2673 = vmatpush1.msra.mxu0 0.0
        %2674 = vmatprep.subr.mxu0 0.0
        %2675 = vmatpush1.msra.mxu0 0.0
        %2676 = vmatprep.subr.mxu0 0.0
        %2677 = vmatpush1.msra.mxu0 0.0
        %2678 = vmatprep.subr.mxu0 0.0
        %2679 = vmatpush1.msra.mxu0 0.0
        %2680 = vmatprep.subr.mxu0 0.0
        %2681 = vmatpush1.msra.mxu0 0.0
        %2682 = vmatprep.subr.mxu0 0.0
        %2683 = vmatpush1.msra.mxu0 0.0
        %2684 = vmatprep.subr.mxu0 0.0
        %2685 = vmatpush1.msra.mxu0 0.0
        %2686 = vmatprep.subr.mxu0 0.0
        %2687 = vmatpush1.msra.mxu0 0.0
        %2688 = vmatprep.subr.mxu0 0.0
        %2689 = vmatpush1.msra.mxu0 0.0
        %2690 = vmatprep.mubr.f32.mxu0 0.0
        %2691 = vmatmul.mubr.f32.gmra.mrb[0].mxu0 %v2617
        %v2692 = vpop.f32.mrb[0].mxu0
        %v2693 = vadd.f32 0.0, %v2692
        %v2694 = vpop.f32.mrb[0].mxu0
        %v2695 = vadd.f32 0.0, %v2694
        %2696 = vdwg.mxu0
        %v2699 = vcombine.low %v2693, %v2695
        %v2701 = vunpack.c.l.s4 1966171168
        %v2702 = vunpack.c.0.s8 %v2701
        %v2703 = vlaneseq
        %v2704 = vshrl.u32 %v2703, 7
        %v2705 = vsub.s32 %v2702, %v2704
        %v2706 = vrot.slane %v2699, %v2705
        %v2708 = vunpack.c.l.s4 1966171168
        %v2709 = vunpack.c.0.s8 %v2708
        %v2710 = vlaneseq
        %v2711 = vshrl.u32 %v2710, 7
        %v2712 = vsub.s32 %v2709, %v2711
        %v2713 = vrot.slane %v2706, %v2712
        %v2715 = vlaneseq
        %vm2716 = vcmp.ge.s32.totalorder %v2715, 0
        %vm2717 = vcmp.lt.s32.totalorder %v2715, 256
        %vm2718 = vmand %vm2716, %vm2717
        %2719 = vst.msk [vmem:[%s271] sm:$0x3] %vm2718, %v2713
        %s2720 = sand.u32 %s181, 1
        %s2721 = scalar_lea.sflag [#allocation3], %s2720
        %s2722 = sand.u32 %s181, 1
        %s2723 = smul.addr %s2722, 2
        %s2724 = scalar_lea.vmem [#allocation2], %s2723
        // Predicated region
        $region49: #{tpu_custom_call.1} parent=47 // pred_check
          %p2725 = pneg %p191
        $region50: #{tpu_custom_call.1} parent=47 // pred_check_branch
          %2727 = sbr.rel (%p2725) target = $region52
        $region51: #{tpu_custom_call.1} parent=47 // pred_region
          %s2729 = ssub.s32 32, 32
          %2730 = vsyncadd %s2721, %s2729
          %s2731 = smul.addr %s21, 2
          %s2732 = smul.addr %s2731, 16
          %s2733 = scalar_lea.hbm %s7, %s2732
          %s2735 = sshll.u32 %s2724, 4
          %s2736 = int_to_ptr.vmem [resolvable:$true] %s2735
          %2738 = dma.vmem_to_hbm [thread:$0]  %s2736, 32, %s2733, %s2721
        $region52: #{tpu_custom_call.1} parent=47 // pred_fallthru
          _
      $region48: #{tpu_custom_call.1} parent=5 // pred_fallthru
        _
      %p2739 = scmp.le.s32.totalorder 2, %s16
      // Predicated region
      $region53: #{tpu_custom_call.1} parent=5 // pred_check
        %p2740 = pneg %p2739
      $region54: #{tpu_custom_call.1} parent=5 // pred_check_branch
        %2742 = sbr.rel (%p2740) target = $region56
      $region55: #{tpu_custom_call.1} parent=5 // pred_region
        %s2743 = ssub.s32 %s16, 2
        // Predicated region
        $region57: #{tpu_custom_call.1} parent=55 // pred_check
          %p2744 = pneg %p197
        $region58: #{tpu_custom_call.1} parent=55 // pred_check_branch
          %2746 = sbr.rel (%p2744) target = $region60
        $region59: #{tpu_custom_call.1} parent=55 // pred_region
          %s2747 = sand.u32 %s182, 1
          %s2748 = scalar_lea.sflag [#allocation3], %s2747
          %s2749 = sand.u32 %s182, 1
          %s2750 = smul.addr %s2749, 2
          %s2751 = scalar_lea.vmem [#allocation2], %s2750
          %2752 = dma.done %s2748, 32
        $region60: #{tpu_custom_call.1} parent=55 // pred_fallthru
          _
      $region56: #{tpu_custom_call.1} parent=5 // pred_fallthru
        _
    $region6: #{tpu_custom_call.1} parent=1 // loop_footer
      %s20 = sadd.s32 1, %s16
    $region7: #{tpu_custom_call.1} parent=1 // loop_footer_branch
      %15 = sbr.rel target = $region3
    $region8: #{tpu_custom_call.1} parent=1 // loop_exit
      _
    %2753 = vsyncpa [#allocation3], 1
    %s2754 = scalar_lea.sflag [#allocation3], 1
    %2755 = vsyncpa %s2754, 1

</llo_original>
